<compile_context>
chip_gen: v7x
topology: tpu7x:2x2x1
jax: 0.10.0
libtpu: 0.0.40
codegen_flags: <defaults>
</compile_context>

<pallas_src>
import functools

import jax
import jax.numpy as jnp
from jax.experimental import pallas as pl
from jax.experimental.pallas import tpu as pltpu

_LN_EPS = 1e-5


def _layernorm(x, gamma, beta):
    mu = jnp.mean(x, axis=-1, keepdims=True)
    var = jnp.mean((x - mu) ** 2, axis=-1, keepdims=True)
    return (x - mu) * jax.lax.rsqrt(var + _LN_EPS) * gamma + beta


def attn_block_kernel(x_ref, g1_ref, be1_ref, wq_ref, wk_ref, wv_ref,
                      wp_ref, bp_ref, o_ref, *, n_head, compute_dtype):
    xb = x_ref[0].astype(jnp.float32)                 # (T, C)
    T, C = xb.shape
    hs = C // n_head
    scale = 1.0 / (hs ** 0.5)

    xn = _layernorm(xb, g1_ref[...].astype(jnp.float32),
                    be1_ref[...].astype(jnp.float32))
    xc = xn.astype(compute_dtype)

    q = jnp.dot(xc, wq_ref[...], preferred_element_type=jnp.float32)
    k = jnp.dot(xc, wk_ref[...], preferred_element_type=jnp.float32)
    v = jnp.dot(xc, wv_ref[...], preferred_element_type=jnp.float32)

    row = jax.lax.broadcasted_iota(jnp.int32, (T, T), 0)
    col = jax.lax.broadcasted_iota(jnp.int32, (T, T), 1)
    causal = col <= row

    wp = wp_ref[...]
    # Fold the projection bias into the accumulator; accumulate per-head
    # out_h @ Wp[h] instead of concatenating heads (same math, no lane concat).
    acc = jnp.zeros((T, C), jnp.float32) + bp_ref[...].astype(jnp.float32)
    for h in range(n_head):                            # static loop over heads
        s = h * hs
        qh = q[:, s:s + hs].astype(compute_dtype)
        kh = k[:, s:s + hs].astype(compute_dtype)
        vh = v[:, s:s + hs].astype(compute_dtype)
        sc = jnp.dot(qh, kh.T, preferred_element_type=jnp.float32) * scale
        sc = jnp.where(causal, sc, -1e30)
        sc = sc - jnp.max(sc, axis=-1, keepdims=True)
        p = jnp.exp(sc)
        p = p / jnp.sum(p, axis=-1, keepdims=True)
        # attention-prob dropout: eval mode -> identity
        oh = jnp.dot(p.astype(compute_dtype), vh, preferred_element_type=jnp.float32)
        acc = acc + jnp.dot(oh.astype(compute_dtype), wp[s:s + hs, :],
                            preferred_element_type=jnp.float32)
    # proj-output dropout: eval mode -> identity
    o_ref[0] = (xb + acc).astype(o_ref.dtype)


def ffn_block_kernel(x_ref, g2_ref, be2_ref, w1_ref, b1_ref, w2_ref, b2_ref,
                     o_ref, *, hidden_chunk, compute_dtype):
    xb = x_ref[...].astype(jnp.float32)                # (tm, C)
    tm, C = xb.shape
    H = w1_ref.shape[1]

    xn = _layernorm(xb, g2_ref[...].astype(jnp.float32),
                    be2_ref[...].astype(jnp.float32))
    xc = xn.astype(compute_dtype)

    # Fold the second bias into the f32 accumulator (hoisted broadcast).
    acc = jnp.zeros((tm, C), jnp.float32) + b2_ref[...].astype(jnp.float32)

    # Chunk the hidden dim so the (tm, 4C) intermediate never fully materializes.
    n_chunks = (H + hidden_chunk - 1) // hidden_chunk
    for c in range(n_chunks):                          # static, short, unrolled
        c0 = c * hidden_chunk
        cs = min(hidden_chunk, H - c0)
        h = jnp.dot(xc, w1_ref[:, c0:c0 + cs], preferred_element_type=jnp.float32)
        h = jnp.maximum(h + b1_ref[:, c0:c0 + cs].astype(jnp.float32), 0.0)
        acc = acc + jnp.dot(h.astype(compute_dtype), w2_ref[c0:c0 + cs, :],
                            preferred_element_type=jnp.float32)
    # FFN-output dropout: eval mode -> identity
    o_ref[...] = (xb + acc).astype(o_ref.dtype)


def _round_up(n, m):
    return ((n + m - 1) // m) * m


def transformer_block(x, params, *, n_head, compute_dtype=None,
                      row_tile=256, hidden_chunk=512):
    """Pallas forward of Block: x + MHA(LN1(x)), then + FFN(LN2(x))."""
    (g1, be1, wq, wk, wv, wp, bp, g2, be2, w1, b1, w2, b2) = params
    B, T, C = x.shape
    H = w1.shape[1]
    cd = x.dtype if compute_dtype is None else compute_dtype

    g1_2d, be1_2d = g1.reshape(1, C), be1.reshape(1, C)
    g2_2d, be2_2d = g2.reshape(1, C), be2.reshape(1, C)
    bp_2d, b1_2d, b2_2d = bp.reshape(1, C), b1.reshape(1, H), b2.reshape(1, C)
    wq_c, wk_c, wv_c, wp_c = (w.astype(cd) for w in (wq, wk, wv, wp))
    w1_c, w2_c = w1.astype(cd), w2.astype(cd)

    # ---- kernel 1: attention sub-block, grid over batch ("parallel" -> 2 TCs on v7x)
    x_att = pl.pallas_call(
        functools.partial(attn_block_kernel, n_head=n_head, compute_dtype=cd),
        out_shape=jax.ShapeDtypeStruct((B, T, C), x.dtype),
        grid_spec=pltpu.PrefetchScalarGridSpec(
            num_scalar_prefetch=0,
            grid=(B,),
            in_specs=[
                pl.BlockSpec((1, T, C), lambda b: (b, 0, 0)),   # x
                pl.BlockSpec((1, C), lambda b: (0, 0)),          # ln1 gamma
                pl.BlockSpec((1, C), lambda b: (0, 0)),          # ln1 beta
                pl.BlockSpec((C, C), lambda b: (0, 0)),          # Wq
                pl.BlockSpec((C, C), lambda b: (0, 0)),          # Wk
                pl.BlockSpec((C, C), lambda b: (0, 0)),          # Wv
                pl.BlockSpec((C, C), lambda b: (0, 0)),          # Wproj
                pl.BlockSpec((1, C), lambda b: (0, 0)),          # bproj
            ],
            out_specs=pl.BlockSpec((1, T, C), lambda b: (b, 0, 0)),
        ),
        compiler_params=pltpu.CompilerParams(
            dimension_semantics=("parallel",)),
    )(x, g1_2d, be1_2d, wq_c, wk_c, wv_c, wp_c, bp_2d)

    # ---- kernel 2: FFN sub-block, tiled over M = B*T rows (pipelined x DMA)
    M = B * T
    tm = min(row_tile, _round_up(M, 8))    # sublane-aligned row tile
    Mp = _round_up(M, tm)                  # pad so floor-div grid drops no rows
    x2d = x_att.reshape(M, C)
    if Mp != M:
        x2d = jnp.pad(x2d, ((0, Mp - M), (0, 0)))
    hc = min(hidden_chunk, H)

    out2d = pl.pallas_call(
        functools.partial(ffn_block_kernel, hidden_chunk=hc, compute_dtype=cd),
        out_shape=jax.ShapeDtypeStruct((Mp, C), x.dtype),
        grid_spec=pltpu.PrefetchScalarGridSpec(
            num_scalar_prefetch=0,
            grid=(Mp // tm,),
            in_specs=[
                pl.BlockSpec((tm, C), lambda i: (i, 0)),   # x rows (pipelined)
                pl.BlockSpec((1, C), lambda i: (0, 0)),    # ln2 gamma
                pl.BlockSpec((1, C), lambda i: (0, 0)),    # ln2 beta
                pl.BlockSpec((C, H), lambda i: (0, 0)),    # w1 (resident)
                pl.BlockSpec((1, H), lambda i: (0, 0)),    # b1
                pl.BlockSpec((H, C), lambda i: (0, 0)),    # w2 (resident)
                pl.BlockSpec((1, C), lambda i: (0, 0)),    # b2
            ],
            out_specs=pl.BlockSpec((tm, C), lambda i: (i, 0)),
        ),
        compiler_params=pltpu.CompilerParams(
            dimension_semantics=("parallel",)),
    )(x2d, g2_2d, be2_2d, w1_c, b1_2d, w2_c, b2_2d)

    return out2d[:M].reshape(B, T, C)


def init_params(key, n_embd):
    """Init mirroring nn.Linear (uniform +/- 1/sqrt(fan_in)) and nn.LayerNorm defaults."""
    C = n_embd
    H = 4 * C
    ks = jax.random.split(key, 9)
    bC = 1.0 / float(jnp.sqrt(C))
    bH = 1.0 / float(jnp.sqrt(H))
    wq = jax.random.uniform(ks[0], (C, C), jnp.float32, -bC, bC)
    wk = jax.random.uniform(ks[1], (C, C), jnp.float32, -bC, bC)
    wv = jax.random.uniform(ks[2], (C, C), jnp.float32, -bC, bC)
    wp = jax.random.uniform(ks[3], (C, C), jnp.float32, -bC, bC)
    bp = jax.random.uniform(ks[4], (C,), jnp.float32, -bC, bC)
    w1 = jax.random.uniform(ks[5], (C, H), jnp.float32, -bC, bC)
    b1 = jax.random.uniform(ks[6], (H,), jnp.float32, -bC, bC)
    w2 = jax.random.uniform(ks[7], (H, C), jnp.float32, -bH, bH)
    b2 = jax.random.uniform(ks[8], (C,), jnp.float32, -bH, bH)
    g1, be1 = jnp.ones((C,), jnp.float32), jnp.zeros((C,), jnp.float32)
    g2, be2 = jnp.ones((C,), jnp.float32), jnp.zeros((C,), jnp.float32)
    return (g1, be1, wq, wk, wv, wp, bp, g2, be2, w1, b1, w2, b2)


def block_reference(x, params, *, n_head):
    """Plain-JAX reference of Block.forward (eval-mode dropout)."""
    (g1, be1, wq, wk, wv, wp, bp, g2, be2, w1, b1, w2, b2) = params
    B, T, C = x.shape
    hs = C // n_head

    def ln(z, g, b):
        mu = z.mean(-1, keepdims=True)
        var = ((z - mu) ** 2).mean(-1, keepdims=True)
        return (z - mu) / jnp.sqrt(var + _LN_EPS) * g + b

    xn = ln(x, g1, be1)
    q, k, v = xn @ wq, xn @ wk, xn @ wv
    mask = jnp.tril(jnp.ones((T, T), bool))
    outs = []
    for h in range(n_head):
        s = h * hs
        qh, kh, vh = q[..., s:s + hs], k[..., s:s + hs], v[..., s:s + hs]
        sc = qh @ jnp.swapaxes(kh, -1, -2) * (hs ** -0.5)
        sc = jnp.where(mask, sc, -jnp.inf)
        outs.append(jax.nn.softmax(sc, axis=-1) @ vh)
    att = jnp.concatenate(outs, -1) @ wp + bp
    x = x + att
    xn2 = ln(x, g2, be2)
    ff = jnp.maximum(xn2 @ w1 + b1, 0.0) @ w2 + b2
    return x + ff


if __name__ == "__main__":
    key = jax.random.PRNGKey(0)
    kx, kp = jax.random.split(key)

    B, T, n_embd, n_head = 2, 8, 32, 4
    block_size = T          # causal mask spans the full demo sequence
    dropout_rate = 0.1      # eval mode -> identity

    x = jax.random.normal(kx, (B, T, n_embd), jnp.float32)
    params = init_params(kp, n_embd)

    ref = block_reference(x, params, n_head=n_head)

    # f32 path (tight check)
    out = transformer_block(x, params, n_head=n_head)
    out = jax.block_until_ready(out)
    assert out.shape == (B, T, n_embd)
    assert jnp.allclose(out, ref, atol=1e-3, rtol=1e-3), \
        float(jnp.max(jnp.abs(out - ref)))

    # bf16-on-MXU path (per perf feedback): bf16 operands, f32 accumulation.
    out_bf16 = transformer_block(x, params, n_head=n_head,
                                 compute_dtype=jnp.bfloat16)
    out_bf16 = jax.block_until_ready(out_bf16)
    assert jnp.allclose(out_bf16, ref, atol=1e-1, rtol=0.0), \
        float(jnp.max(jnp.abs(out_bf16 - ref)))

    print("KERNEL_OK")
</pallas_src>

<mosaic_0001>
module attributes {stable_mosaic.version = 11 : i64} {
  func.func @attn_block_kernel(%arg0: i32, %arg1: memref<1x8x32xf32, #tpu.memory_space<vmem>>, %arg2: memref<1x32xf32, #tpu.memory_space<vmem>>, %arg3: memref<1x32xf32, #tpu.memory_space<vmem>>, %arg4: memref<32x32xf32, #tpu.memory_space<vmem>>, %arg5: memref<32x32xf32, #tpu.memory_space<vmem>>, %arg6: memref<32x32xf32, #tpu.memory_space<vmem>>, %arg7: memref<32x32xf32, #tpu.memory_space<vmem>>, %arg8: memref<1x32xf32, #tpu.memory_space<vmem>>, %arg9: memref<1x8x32xf32, #tpu.memory_space<vmem>>) attributes {dimension_semantics = [#tpu.dimension_semantics<parallel>], iteration_bounds = array<i64: 2>, scalar_prefetch = 0 : i64, scratch_operands = 0 : i64, tpu.core_type = #tpu.core_type<tc>, window_params = [{transform_indices = @transform_0, window_bounds = array<i64: 1, 8, 32>}, {pipeline_mode = #tpu.pipeline_mode<synchronous>, transform_indices = @transform_1, window_bounds = array<i64: 1, 32>}, {pipeline_mode = #tpu.pipeline_mode<synchronous>, transform_indices = @transform_2, window_bounds = array<i64: 1, 32>}, {pipeline_mode = #tpu.pipeline_mode<synchronous>, transform_indices = @transform_3, window_bounds = array<i64: 32, 32>}, {pipeline_mode = #tpu.pipeline_mode<synchronous>, transform_indices = @transform_4, window_bounds = array<i64: 32, 32>}, {pipeline_mode = #tpu.pipeline_mode<synchronous>, transform_indices = @transform_5, window_bounds = array<i64: 32, 32>}, {pipeline_mode = #tpu.pipeline_mode<synchronous>, transform_indices = @transform_6, window_bounds = array<i64: 32, 32>}, {pipeline_mode = #tpu.pipeline_mode<synchronous>, transform_indices = @transform_7, window_bounds = array<i64: 1, 32>}, {transform_indices = @transform_8, window_bounds = array<i64: 1, 8, 32>}]} {
    %c0 = arith.constant 0 : index
    %c0_0 = arith.constant 0 : index
    %c0_1 = arith.constant 0 : index
    %0 = vector.load %arg1[%c0, %c0_0, %c0_1] : memref<1x8x32xf32, #tpu.memory_space<vmem>>, vector<1x8x32xf32>
    %1 = vector.shape_cast %0 : vector<1x8x32xf32> to vector<8x32xf32>
    %c0_2 = arith.constant 0 : index
    %c0_3 = arith.constant 0 : index
    %2 = vector.load %arg2[%c0_2, %c0_3] : memref<1x32xf32, #tpu.memory_space<vmem>>, vector<1x32xf32>
    %c0_4 = arith.constant 0 : index
    %c0_5 = arith.constant 0 : index
    %3 = vector.load %arg3[%c0_4, %c0_5] : memref<1x32xf32, #tpu.memory_space<vmem>>, vector<1x32xf32>
    %cst = arith.constant dense<0.000000e+00> : vector<8xf32>
    %4 = vector.multi_reduction <add>, %1, %cst [1] : vector<8x32xf32> to vector<8xf32>
    %5 = vector.shape_cast %4 : vector<8xf32> to vector<8x1xf32>
    %cst_6 = arith.constant 3.200000e+01 : f32
    %6 = vector.broadcast %cst_6 : f32 to vector<8x1xf32>
    %7 = arith.divf %5, %6 : vector<8x1xf32>
    %8 = vector.broadcast %7 : vector<8x1xf32> to vector<8x32xf32>
    %9 = arith.subf %1, %8 : vector<8x32xf32>
    %10 = arith.mulf %9, %9 : vector<8x32xf32>
    %cst_7 = arith.constant dense<0.000000e+00> : vector<8xf32>
    %11 = vector.multi_reduction <add>, %10, %cst_7 [1] : vector<8x32xf32> to vector<8xf32>
    %12 = vector.shape_cast %11 : vector<8xf32> to vector<8x1xf32>
    %cst_8 = arith.constant 3.200000e+01 : f32
    %13 = vector.broadcast %cst_8 : f32 to vector<8x1xf32>
    %14 = arith.divf %12, %13 : vector<8x1xf32>
    %15 = vector.broadcast %7 : vector<8x1xf32> to vector<8x32xf32>
    %16 = arith.subf %1, %15 : vector<8x32xf32>
    %cst_9 = arith.constant 9.99999974E-6 : f32
    %17 = vector.broadcast %cst_9 : f32 to vector<8x1xf32>
    %18 = arith.addf %14, %17 : vector<8x1xf32>
    %19 = math.rsqrt %18 : vector<8x1xf32>
    %20 = vector.broadcast %19 : vector<8x1xf32> to vector<8x32xf32>
    %21 = arith.mulf %16, %20 : vector<8x32xf32>
    %22 = vector.broadcast %2 : vector<1x32xf32> to vector<8x32xf32>
    %23 = arith.mulf %21, %22 : vector<8x32xf32>
    %24 = vector.broadcast %3 : vector<1x32xf32> to vector<8x32xf32>
    %25 = arith.addf %23, %24 : vector<8x32xf32>
    %c0_10 = arith.constant 0 : index
    %c0_11 = arith.constant 0 : index
    %26 = vector.load %arg4[%c0_10, %c0_11] : memref<32x32xf32, #tpu.memory_space<vmem>>, vector<32x32xf32>
    %cst_12 = arith.constant dense<0.000000e+00> : vector<8x32xf32>
    %27 = tpu.matmul %25, %26, %cst_12 {dimension_numbers = #tpu.dot_dimension_numbers<[1], [0], [0], [1], [0, 0, 1, 1], [], []>} : vector<8x32xf32>, vector<32x32xf32>, vector<8x32xf32> -> vector<8x32xf32>
    %c0_13 = arith.constant 0 : index
    %c0_14 = arith.constant 0 : index
    %28 = vector.load %arg5[%c0_13, %c0_14] : memref<32x32xf32, #tpu.memory_space<vmem>>, vector<32x32xf32>
    %cst_15 = arith.constant dense<0.000000e+00> : vector<8x32xf32>
    %29 = tpu.matmul %25, %28, %cst_15 {dimension_numbers = #tpu.dot_dimension_numbers<[1], [0], [0], [1], [0, 0, 1, 1], [], []>} : vector<8x32xf32>, vector<32x32xf32>, vector<8x32xf32> -> vector<8x32xf32>
    %c0_16 = arith.constant 0 : index
    %c0_17 = arith.constant 0 : index
    %30 = vector.load %arg6[%c0_16, %c0_17] : memref<32x32xf32, #tpu.memory_space<vmem>>, vector<32x32xf32>
    %cst_18 = arith.constant dense<0.000000e+00> : vector<8x32xf32>
    %31 = tpu.matmul %25, %30, %cst_18 {dimension_numbers = #tpu.dot_dimension_numbers<[1], [0], [0], [1], [0, 0, 1, 1], [], []>} : vector<8x32xf32>, vector<32x32xf32>, vector<8x32xf32> -> vector<8x32xf32>
    %32 = tpu.iota {dimensions = array<i32: 0>} : vector<8x8xi32>
    %33 = tpu.iota {dimensions = array<i32: 1>} : vector<8x8xi32>
    %34 = arith.cmpi sle, %33, %32 : vector<8x8xi32>
    %c0_19 = arith.constant 0 : index
    %c0_20 = arith.constant 0 : index
    %35 = vector.load %arg7[%c0_19, %c0_20] : memref<32x32xf32, #tpu.memory_space<vmem>>, vector<32x32xf32>
    %cst_21 = arith.constant 0.000000e+00 : f32
    %36 = vector.broadcast %cst_21 : f32 to vector<8x32xf32>
    %c0_22 = arith.constant 0 : index
    %c0_23 = arith.constant 0 : index
    %37 = vector.load %arg8[%c0_22, %c0_23] : memref<1x32xf32, #tpu.memory_space<vmem>>, vector<1x32xf32>
    %38 = vector.broadcast %37 : vector<1x32xf32> to vector<8x32xf32>
    %39 = arith.addf %36, %38 : vector<8x32xf32>
    %40 = vector.extract_strided_slice %27 {offsets = [0, 0], sizes = [8, 8], strides = [1, 1]} : vector<8x32xf32> to vector<8x8xf32>
    %41 = vector.extract_strided_slice %29 {offsets = [0, 0], sizes = [8, 8], strides = [1, 1]} : vector<8x32xf32> to vector<8x8xf32>
    %42 = vector.extract_strided_slice %31 {offsets = [0, 0], sizes = [8, 8], strides = [1, 1]} : vector<8x32xf32> to vector<8x8xf32>
    %43 = tpu.transpose %41, [1, 0] : vector<8x8xf32> -> vector<8x8xf32>
    %cst_24 = arith.constant dense<0.000000e+00> : vector<8x8xf32>
    %44 = tpu.matmul %40, %43, %cst_24 {dimension_numbers = #tpu.dot_dimension_numbers<[1], [0], [0], [1], [0, 0, 1, 1], [], []>} : vector<8x8xf32>, vector<8x8xf32>, vector<8x8xf32> -> vector<8x8xf32>
    %cst_25 = arith.constant 0.353553385 : f32
    %45 = vector.broadcast %cst_25 : f32 to vector<8x8xf32>
    %46 = arith.mulf %44, %45 : vector<8x8xf32>
    %cst_26 = arith.constant -1.000000e+30 : f32
    %47 = vector.broadcast %cst_26 : f32 to vector<8x8xf32>
    %48 = arith.select %34, %46, %47 : vector<8x8xi1>, vector<8x8xf32>
    %cst_27 = arith.constant dense<0xFF800000> : vector<8xf32>
    %49 = vector.multi_reduction <maximumf>, %48, %cst_27 [1] : vector<8x8xf32> to vector<8xf32>
    %50 = vector.shape_cast %49 : vector<8xf32> to vector<8x1xf32>
    %51 = vector.broadcast %50 : vector<8x1xf32> to vector<8x8xf32>
    %52 = arith.subf %48, %51 : vector<8x8xf32>
    %53 = math.exp %52 : vector<8x8xf32>
    %cst_28 = arith.constant dense<0.000000e+00> : vector<8xf32>
    %54 = vector.multi_reduction <add>, %53, %cst_28 [1] : vector<8x8xf32> to vector<8xf32>
    %55 = vector.shape_cast %54 : vector<8xf32> to vector<8x1xf32>
    %56 = vector.broadcast %55 : vector<8x1xf32> to vector<8x8xf32>
    %57 = arith.divf %53, %56 : vector<8x8xf32>
    %cst_29 = arith.constant dense<0.000000e+00> : vector<8x8xf32>
    %58 = tpu.matmul %57, %42, %cst_29 {dimension_numbers = #tpu.dot_dimension_numbers<[1], [0], [0], [1], [0, 0, 1, 1], [], []>} : vector<8x8xf32>, vector<8x8xf32>, vector<8x8xf32> -> vector<8x8xf32>
    %59 = vector.extract_strided_slice %35 {offsets = [0, 0], sizes = [8, 32], strides = [1, 1]} : vector<32x32xf32> to vector<8x32xf32>
    %cst_30 = arith.constant dense<0.000000e+00> : vector<8x32xf32>
    %60 = tpu.matmul %58, %59, %cst_30 {dimension_numbers = #tpu.dot_dimension_numbers<[1], [0], [0], [1], [0, 0, 1, 1], [], []>} : vector<8x8xf32>, vector<8x32xf32>, vector<8x32xf32> -> vector<8x32xf32>
    %61 = arith.addf %39, %60 : vector<8x32xf32>
    %62 = vector.extract_strided_slice %27 {offsets = [0, 8], sizes = [8, 8], strides = [1, 1]} : vector<8x32xf32> to vector<8x8xf32>
    %63 = vector.extract_strided_slice %29 {offsets = [0, 8], sizes = [8, 8], strides = [1, 1]} : vector<8x32xf32> to vector<8x8xf32>
    %64 = vector.extract_strided_slice %31 {offsets = [0, 8], sizes = [8, 8], strides = [1, 1]} : vector<8x32xf32> to vector<8x8xf32>
    %65 = tpu.transpose %63, [1, 0] : vector<8x8xf32> -> vector<8x8xf32>
    %cst_31 = arith.constant dense<0.000000e+00> : vector<8x8xf32>
    %66 = tpu.matmul %62, %65, %cst_31 {dimension_numbers = #tpu.dot_dimension_numbers<[1], [0], [0], [1], [0, 0, 1, 1], [], []>} : vector<8x8xf32>, vector<8x8xf32>, vector<8x8xf32> -> vector<8x8xf32>
    %cst_32 = arith.constant 0.353553385 : f32
    %67 = vector.broadcast %cst_32 : f32 to vector<8x8xf32>
    %68 = arith.mulf %66, %67 : vector<8x8xf32>
    %cst_33 = arith.constant -1.000000e+30 : f32
    %69 = vector.broadcast %cst_33 : f32 to vector<8x8xf32>
    %70 = arith.select %34, %68, %69 : vector<8x8xi1>, vector<8x8xf32>
    %cst_34 = arith.constant dense<0xFF800000> : vector<8xf32>
    %71 = vector.multi_reduction <maximumf>, %70, %cst_34 [1] : vector<8x8xf32> to vector<8xf32>
    %72 = vector.shape_cast %71 : vector<8xf32> to vector<8x1xf32>
    %73 = vector.broadcast %72 : vector<8x1xf32> to vector<8x8xf32>
    %74 = arith.subf %70, %73 : vector<8x8xf32>
    %75 = math.exp %74 : vector<8x8xf32>
    %cst_35 = arith.constant dense<0.000000e+00> : vector<8xf32>
    %76 = vector.multi_reduction <add>, %75, %cst_35 [1] : vector<8x8xf32> to vector<8xf32>
    %77 = vector.shape_cast %76 : vector<8xf32> to vector<8x1xf32>
    %78 = vector.broadcast %77 : vector<8x1xf32> to vector<8x8xf32>
    %79 = arith.divf %75, %78 : vector<8x8xf32>
    %cst_36 = arith.constant dense<0.000000e+00> : vector<8x8xf32>
    %80 = tpu.matmul %79, %64, %cst_36 {dimension_numbers = #tpu.dot_dimension_numbers<[1], [0], [0], [1], [0, 0, 1, 1], [], []>} : vector<8x8xf32>, vector<8x8xf32>, vector<8x8xf32> -> vector<8x8xf32>
    %81 = vector.extract_strided_slice %35 {offsets = [8, 0], sizes = [8, 32], strides = [1, 1]} : vector<32x32xf32> to vector<8x32xf32>
    %cst_37 = arith.constant dense<0.000000e+00> : vector<8x32xf32>
    %82 = tpu.matmul %80, %81, %cst_37 {dimension_numbers = #tpu.dot_dimension_numbers<[1], [0], [0], [1], [0, 0, 1, 1], [], []>} : vector<8x8xf32>, vector<8x32xf32>, vector<8x32xf32> -> vector<8x32xf32>
    %83 = arith.addf %61, %82 : vector<8x32xf32>
    %84 = vector.extract_strided_slice %27 {offsets = [0, 16], sizes = [8, 8], strides = [1, 1]} : vector<8x32xf32> to vector<8x8xf32>
    %85 = vector.extract_strided_slice %29 {offsets = [0, 16], sizes = [8, 8], strides = [1, 1]} : vector<8x32xf32> to vector<8x8xf32>
    %86 = vector.extract_strided_slice %31 {offsets = [0, 16], sizes = [8, 8], strides = [1, 1]} : vector<8x32xf32> to vector<8x8xf32>
    %87 = tpu.transpose %85, [1, 0] : vector<8x8xf32> -> vector<8x8xf32>
    %cst_38 = arith.constant dense<0.000000e+00> : vector<8x8xf32>
    %88 = tpu.matmul %84, %87, %cst_38 {dimension_numbers = #tpu.dot_dimension_numbers<[1], [0], [0], [1], [0, 0, 1, 1], [], []>} : vector<8x8xf32>, vector<8x8xf32>, vector<8x8xf32> -> vector<8x8xf32>
    %cst_39 = arith.constant 0.353553385 : f32
    %89 = vector.broadcast %cst_39 : f32 to vector<8x8xf32>
    %90 = arith.mulf %88, %89 : vector<8x8xf32>
    %cst_40 = arith.constant -1.000000e+30 : f32
    %91 = vector.broadcast %cst_40 : f32 to vector<8x8xf32>
    %92 = arith.select %34, %90, %91 : vector<8x8xi1>, vector<8x8xf32>
    %cst_41 = arith.constant dense<0xFF800000> : vector<8xf32>
    %93 = vector.multi_reduction <maximumf>, %92, %cst_41 [1] : vector<8x8xf32> to vector<8xf32>
    %94 = vector.shape_cast %93 : vector<8xf32> to vector<8x1xf32>
    %95 = vector.broadcast %94 : vector<8x1xf32> to vector<8x8xf32>
    %96 = arith.subf %92, %95 : vector<8x8xf32>
    %97 = math.exp %96 : vector<8x8xf32>
    %cst_42 = arith.constant dense<0.000000e+00> : vector<8xf32>
    %98 = vector.multi_reduction <add>, %97, %cst_42 [1] : vector<8x8xf32> to vector<8xf32>
    %99 = vector.shape_cast %98 : vector<8xf32> to vector<8x1xf32>
    %100 = vector.broadcast %99 : vector<8x1xf32> to vector<8x8xf32>
    %101 = arith.divf %97, %100 : vector<8x8xf32>
    %cst_43 = arith.constant dense<0.000000e+00> : vector<8x8xf32>
    %102 = tpu.matmul %101, %86, %cst_43 {dimension_numbers = #tpu.dot_dimension_numbers<[1], [0], [0], [1], [0, 0, 1, 1], [], []>} : vector<8x8xf32>, vector<8x8xf32>, vector<8x8xf32> -> vector<8x8xf32>
    %103 = vector.extract_strided_slice %35 {offsets = [16, 0], sizes = [8, 32], strides = [1, 1]} : vector<32x32xf32> to vector<8x32xf32>
    %cst_44 = arith.constant dense<0.000000e+00> : vector<8x32xf32>
    %104 = tpu.matmul %102, %103, %cst_44 {dimension_numbers = #tpu.dot_dimension_numbers<[1], [0], [0], [1], [0, 0, 1, 1], [], []>} : vector<8x8xf32>, vector<8x32xf32>, vector<8x32xf32> -> vector<8x32xf32>
    %105 = arith.addf %83, %104 : vector<8x32xf32>
    %106 = vector.extract_strided_slice %27 {offsets = [0, 24], sizes = [8, 8], strides = [1, 1]} : vector<8x32xf32> to vector<8x8xf32>
    %107 = vector.extract_strided_slice %29 {offsets = [0, 24], sizes = [8, 8], strides = [1, 1]} : vector<8x32xf32> to vector<8x8xf32>
    %108 = vector.extract_strided_slice %31 {offsets = [0, 24], sizes = [8, 8], strides = [1, 1]} : vector<8x32xf32> to vector<8x8xf32>
    %109 = tpu.transpose %107, [1, 0] : vector<8x8xf32> -> vector<8x8xf32>
    %cst_45 = arith.constant dense<0.000000e+00> : vector<8x8xf32>
    %110 = tpu.matmul %106, %109, %cst_45 {dimension_numbers = #tpu.dot_dimension_numbers<[1], [0], [0], [1], [0, 0, 1, 1], [], []>} : vector<8x8xf32>, vector<8x8xf32>, vector<8x8xf32> -> vector<8x8xf32>
    %cst_46 = arith.constant 0.353553385 : f32
    %111 = vector.broadcast %cst_46 : f32 to vector<8x8xf32>
    %112 = arith.mulf %110, %111 : vector<8x8xf32>
    %cst_47 = arith.constant -1.000000e+30 : f32
    %113 = vector.broadcast %cst_47 : f32 to vector<8x8xf32>
    %114 = arith.select %34, %112, %113 : vector<8x8xi1>, vector<8x8xf32>
    %cst_48 = arith.constant dense<0xFF800000> : vector<8xf32>
    %115 = vector.multi_reduction <maximumf>, %114, %cst_48 [1] : vector<8x8xf32> to vector<8xf32>
    %116 = vector.shape_cast %115 : vector<8xf32> to vector<8x1xf32>
    %117 = vector.broadcast %116 : vector<8x1xf32> to vector<8x8xf32>
    %118 = arith.subf %114, %117 : vector<8x8xf32>
    %119 = math.exp %118 : vector<8x8xf32>
    %cst_49 = arith.constant dense<0.000000e+00> : vector<8xf32>
    %120 = vector.multi_reduction <add>, %119, %cst_49 [1] : vector<8x8xf32> to vector<8xf32>
    %121 = vector.shape_cast %120 : vector<8xf32> to vector<8x1xf32>
    %122 = vector.broadcast %121 : vector<8x1xf32> to vector<8x8xf32>
    %123 = arith.divf %119, %122 : vector<8x8xf32>
    %cst_50 = arith.constant dense<0.000000e+00> : vector<8x8xf32>
    %124 = tpu.matmul %123, %108, %cst_50 {dimension_numbers = #tpu.dot_dimension_numbers<[1], [0], [0], [1], [0, 0, 1, 1], [], []>} : vector<8x8xf32>, vector<8x8xf32>, vector<8x8xf32> -> vector<8x8xf32>
    %125 = vector.extract_strided_slice %35 {offsets = [24, 0], sizes = [8, 32], strides = [1, 1]} : vector<32x32xf32> to vector<8x32xf32>
    %cst_51 = arith.constant dense<0.000000e+00> : vector<8x32xf32>
    %126 = tpu.matmul %124, %125, %cst_51 {dimension_numbers = #tpu.dot_dimension_numbers<[1], [0], [0], [1], [0, 0, 1, 1], [], []>} : vector<8x8xf32>, vector<8x32xf32>, vector<8x32xf32> -> vector<8x32xf32>
    %127 = arith.addf %105, %126 : vector<8x32xf32>
    %128 = arith.addf %1, %127 : vector<8x32xf32>
    %c0_52 = arith.constant 0 : index
    %c0_53 = arith.constant 0 : index
    %c0_54 = arith.constant 0 : index
    %129 = vector.load %arg9[%c0_52, %c0_53, %c0_54] : memref<1x8x32xf32, #tpu.memory_space<vmem>>, vector<1x8x32xf32>
    %130 = vector.shape_cast %129 : vector<1x8x32xf32> to vector<8x32xf32>
    %131 = vector.shape_cast %128 : vector<8x32xf32> to vector<1x8x32xf32>
    tpu.vector_store %arg9[%c0_52, %c0_53, %c0_54], %131 {strides = array<i32>} : memref<1x8x32xf32, #tpu.memory_space<vmem>>, vector<1x8x32xf32>,
    return
  }
  func.func @transform_0(%arg0: i32) -> (i32, i32, i32) {
    %c0_i32 = arith.constant 0 : i32
    %c0_i32_0 = arith.constant 0 : i32
    %c0_i32_1 = arith.constant 0 : i32
    return %arg0, %c0_i32, %c0_i32_0 : i32, i32, i32
  }
  func.func @transform_1(%arg0: i32) -> (i32, i32) {
    %c0_i32 = arith.constant 0 : i32
    %c0_i32_0 = arith.constant 0 : i32
    %c0_i32_1 = arith.constant 0 : i32
    return %c0_i32, %c0_i32_0 : i32, i32
  }
  func.func @transform_2(%arg0: i32) -> (i32, i32) {
    %c0_i32 = arith.constant 0 : i32
    %c0_i32_0 = arith.constant 0 : i32
    %c0_i32_1 = arith.constant 0 : i32
    return %c0_i32, %c0_i32_0 : i32, i32
  }
  func.func @transform_3(%arg0: i32) -> (i32, i32) {
    %c0_i32 = arith.constant 0 : i32
    %c0_i32_0 = arith.constant 0 : i32
    %c0_i32_1 = arith.constant 0 : i32
    return %c0_i32, %c0_i32_0 : i32, i32
  }
  func.func @transform_4(%arg0: i32) -> (i32, i32) {
    %c0_i32 = arith.constant 0 : i32
    %c0_i32_0 = arith.constant 0 : i32
    %c0_i32_1 = arith.constant 0 : i32
    return %c0_i32, %c0_i32_0 : i32, i32
  }
  func.func @transform_5(%arg0: i32) -> (i32, i32) {
    %c0_i32 = arith.constant 0 : i32
    %c0_i32_0 = arith.constant 0 : i32
    %c0_i32_1 = arith.constant 0 : i32
    return %c0_i32, %c0_i32_0 : i32, i32
  }
  func.func @transform_6(%arg0: i32) -> (i32, i32) {
    %c0_i32 = arith.constant 0 : i32
    %c0_i32_0 = arith.constant 0 : i32
    %c0_i32_1 = arith.constant 0 : i32
    return %c0_i32, %c0_i32_0 : i32, i32
  }
  func.func @transform_7(%arg0: i32) -> (i32, i32) {
    %c0_i32 = arith.constant 0 : i32
    %c0_i32_0 = arith.constant 0 : i32
    %c0_i32_1 = arith.constant 0 : i32
    return %c0_i32, %c0_i32_0 : i32, i32
  }
  func.func @transform_8(%arg0: i32) -> (i32, i32, i32) {
    %c0_i32 = arith.constant 0 : i32
    %c0_i32_0 = arith.constant 0 : i32
    %c0_i32_1 = arith.constant 0 : i32
    return %arg0, %c0_i32, %c0_i32_0 : i32, i32, i32
  }
}

</mosaic_0001>

<llo_original>
// kernel: tpu_custom_call.1
$region0: #{tpu_custom_call.1}
  #allocation0 [shape = 'u32[]', space=smem, size = 0x4, offset = 0x4, fixed_abs, tag = 'smem constant byte address 0x4 - core index']
  #allocation1 [shape = 'u32[144,128]{1,0:T(1,128)}', space=vmem, size = 0x12000, scoped, tag = 'internal scratch']
  %s0 = inlined_call_operand.hbm [shape: f32[2,8,32], index: 0, kind: input, shape index: {}]
  %s1 = inlined_call_operand.vmem [shape: f32[1,32], index: 1, kind: input, shape index: {}]
  %s2 = inlined_call_operand.vmem [shape: f32[1,32], index: 2, kind: input, shape index: {}]
  %s3 = inlined_call_operand.hbm [shape: f32[32,32], index: 3, kind: input, shape index: {}]
  %s4 = inlined_call_operand.hbm [shape: f32[32,32], index: 4, kind: input, shape index: {}]
  %s5 = inlined_call_operand.hbm [shape: f32[32,32], index: 5, kind: input, shape index: {}]
  %s6 = inlined_call_operand.hbm [shape: f32[32,32], index: 6, kind: input, shape index: {}]
  %s7 = inlined_call_operand.vmem [shape: f32[1,32], index: 7, kind: input, shape index: {}]
  %s8 = inlined_call_operand.hbm [shape: f32[2,8,32], index: 8, kind: output, shape index: {}]
  %s9 = sld [smem:[#allocation0]]
  $region85: #{tpu_custom_call.1} parent=0
    _
  %s11 = ssub.s32 1, %s9
  %s12 = scalar_select 0, %s11, %s9
  $region1: #{tpu_custom_call.1} parent=0
    #allocation2 [shape = 'u8[8192]{0}', space=vmem, size = 0x2000, scoped, tag = 'input window, operand 0']
    #allocation3 [shape = 's32[2]{0}', space=sflag, size = 0x8, scoped, tag = 'scoped memory for tpu_custom_call.1']
    #allocation4 [shape = 's32[2]{0}', space=sflag, size = 0x8, scoped, tag = 'scoped memory for tpu_custom_call.1']
    #allocation5 [shape = 'u8[16384]{0}', space=vmem, size = 0x4000, scoped, tag = 'input window, operand 3, single buffered']
    #allocation6 [shape = 's32[1]{0}', space=sflag, size = 0x4, scoped, tag = 'scoped memory for tpu_custom_call.1']
    #allocation7 [shape = 'u8[16384]{0}', space=vmem, size = 0x4000, scoped, tag = 'input window, operand 4, single buffered']
    #allocation8 [shape = 'u8[16384]{0}', space=vmem, size = 0x4000, scoped, tag = 'input window, operand 5, single buffered']
    #allocation9 [shape = 's32[1]{0}', space=sflag, size = 0x4, scoped, tag = 'scoped memory for tpu_custom_call.1']
    #allocation10 [shape = 'u8[16384]{0}', space=vmem, size = 0x4000, scoped, tag = 'input window, operand 6, single buffered']
    #allocation11 [shape = 'u8[8192]{0}', space=vmem, size = 0x2000, scoped, tag = 'output window, operand 0']
    %13 = vsyncpa [#allocation3], 0
    %s14 = scalar_lea.sflag [#allocation3], 1
    %15 = vsyncpa %s14, 0
    %16 = vsyncpa [#allocation6], 0
    %17 = vsyncpa [#allocation9], 0
    %18 = vsyncpa [#allocation4], 0
    %s19 = scalar_lea.sflag [#allocation4], 1
    %20 = vsyncpa %s19, 0
    loop: start=0, step=1, limit=4
    $region2: #{tpu_custom_call.1} parent=1 // loop_pre_header
      _
    $region3: #{tpu_custom_call.1} parent=1 // loop_header
      %s22 = sphi 0, %s26
      %p23 = scmp.ge.s32.totalorder %s22, 4
      %s32 = sphi 0, %s34
      %s35 = sphi 0, %s32
      %s36 = sphi 0, %s35
      %s52 = sphi 0, %s36
      %s56 = sphi 0, %s56
      %s58 = sphi 0, %s56
      %s59 = sphi 0, %s58
      %s73 = sphi 0, %s59
      %s77 = sphi 0, %s77
      %s79 = sphi 0, %s77
      %s80 = sphi 0, %s79
      %s94 = sphi 0, %s80
      %s98 = sphi 0, %s98
      %s100 = sphi 0, %s98
      %s101 = sphi 0, %s100
      %s115 = sphi 0, %s101
      %s119 = sphi 0, %s119
      %s121 = sphi 0, %s119
      %s122 = sphi 0, %s121
      %s136 = sphi 0, %s122
      %s140 = sphi 0, %s140
      %s142 = sphi 0, %s140
      %s143 = sphi 0, %s142
      %s157 = sphi 0, %s143
      %s161 = sphi 0, %s161
      %s163 = sphi 0, %s161
      %s164 = sphi 0, %s163
      %s178 = sphi 0, %s164
      %s182 = sphi 0, %s182
      %s184 = sphi 0, %s182
      %s185 = sphi 0, %s184
      %s199 = sphi 0, %s185
      %s205 = sphi 0, %s207
      %s208 = sphi 0, %s205
      %s209 = sphi 0, %s208
      %s225 = sphi 0, %s209
    $region4: #{tpu_custom_call.1} parent=1 // loop_header_branch
      %25 = sbr.rel (%p23) target = $region8
    $region5: #{tpu_custom_call.1} parent=1 // loop_body
      %s27 = ssub.s32 %s22, 1
      %s28 = ssub.s32 %s22, 2
      %s29 = sadd.s32 %s22, 1
      %s30 = ssub.s32 %s22, %s29
      %p31 = scmp.eq.s32.totalorder %s30, 0
      %s33 = sadd.s32 %s32, 1
      %s34 = scalar_select %p31, %s32, %s33
      %p37 = pneg %p31
      %p38 = scmp.eq.s32.totalorder %s22, 1
      %p39 = por %p37, %p38
      %p40 = scmp.ne.s32.totalorder %s32, %s35
      %p41 = scmp.eq.s32.totalorder %s22, 0
      %p42 = por %p40, %p41
      %p43 = scmp.ne.s32.totalorder %s32, %s35
      %p44 = scmp.eq.s32.totalorder %s27, 1
      %p45 = por %p43, %p44
      %p46 = scmp.ne.s32.totalorder %s35, %s36
      %p47 = scmp.eq.s32.totalorder %s27, 0
      %p48 = por %p46, %p47
      %p49 = scmp.ne.s32.totalorder %s35, %s36
      %p50 = scmp.eq.s32.totalorder %s28, 1
      %p51 = por %p49, %p50
      %p53 = scmp.ne.s32.totalorder %s36, %s52
      %p54 = scmp.eq.s32.totalorder %s28, 0
      %p55 = por %p53, %p54
      %s57 = sadd.s32 %s56, 1
      %p60 = scmp.eq.s32.totalorder %s22, 1
      %p61 = scmp.ne.s32.totalorder %s56, %s58
      %p62 = scmp.eq.s32.totalorder %s22, 0
      %p63 = por %p61, %p62
      %p64 = scmp.ne.s32.totalorder %s56, %s58
      %p65 = scmp.eq.s32.totalorder %s27, 1
      %p66 = por %p64, %p65
      %p67 = scmp.ne.s32.totalorder %s58, %s59
      %p68 = scmp.eq.s32.totalorder %s27, 0
      %p69 = por %p67, %p68
      %p70 = scmp.ne.s32.totalorder %s58, %s59
      %p71 = scmp.eq.s32.totalorder %s28, 1
      %p72 = por %p70, %p71
      %p74 = scmp.ne.s32.totalorder %s59, %s73
      %p75 = scmp.eq.s32.totalorder %s28, 0
      %p76 = por %p74, %p75
      %s78 = sadd.s32 %s77, 1
      %p81 = scmp.eq.s32.totalorder %s22, 1
      %p82 = scmp.ne.s32.totalorder %s77, %s79
      %p83 = scmp.eq.s32.totalorder %s22, 0
      %p84 = por %p82, %p83
      %p85 = scmp.ne.s32.totalorder %s77, %s79
      %p86 = scmp.eq.s32.totalorder %s27, 1
      %p87 = por %p85, %p86
      %p88 = scmp.ne.s32.totalorder %s79, %s80
      %p89 = scmp.eq.s32.totalorder %s27, 0
      %p90 = por %p88, %p89
      %p91 = scmp.ne.s32.totalorder %s79, %s80
      %p92 = scmp.eq.s32.totalorder %s28, 1
      %p93 = por %p91, %p92
      %p95 = scmp.ne.s32.totalorder %s80, %s94
      %p96 = scmp.eq.s32.totalorder %s28, 0
      %p97 = por %p95, %p96
      %s99 = sadd.s32 %s98, 1
      %p102 = scmp.eq.s32.totalorder %s22, 1
      %p103 = scmp.ne.s32.totalorder %s98, %s100
      %p104 = scmp.eq.s32.totalorder %s22, 0
      %p105 = por %p103, %p104
      %p106 = scmp.ne.s32.totalorder %s98, %s100
      %p107 = scmp.eq.s32.totalorder %s27, 1
      %p108 = por %p106, %p107
      %p109 = scmp.ne.s32.totalorder %s100, %s101
      %p110 = scmp.eq.s32.totalorder %s27, 0
      %p111 = por %p109, %p110
      %p112 = scmp.ne.s32.totalorder %s100, %s101
      %p113 = scmp.eq.s32.totalorder %s28, 1
      %p114 = por %p112, %p113
      %p116 = scmp.ne.s32.totalorder %s101, %s115
      %p117 = scmp.eq.s32.totalorder %s28, 0
      %p118 = por %p116, %p117
      %s120 = sadd.s32 %s119, 1
      %p123 = scmp.eq.s32.totalorder %s22, 1
      %p124 = scmp.ne.s32.totalorder %s119, %s121
      %p125 = scmp.eq.s32.totalorder %s22, 0
      %p126 = por %p124, %p125
      %p127 = scmp.ne.s32.totalorder %s119, %s121
      %p128 = scmp.eq.s32.totalorder %s27, 1
      %p129 = por %p127, %p128
      %p130 = scmp.ne.s32.totalorder %s121, %s122
      %p131 = scmp.eq.s32.totalorder %s27, 0
      %p132 = por %p130, %p131
      %p133 = scmp.ne.s32.totalorder %s121, %s122
      %p134 = scmp.eq.s32.totalorder %s28, 1
      %p135 = por %p133, %p134
      %p137 = scmp.ne.s32.totalorder %s122, %s136
      %p138 = scmp.eq.s32.totalorder %s28, 0
      %p139 = por %p137, %p138
      %s141 = sadd.s32 %s140, 1
      %p144 = scmp.eq.s32.totalorder %s22, 1
      %p145 = scmp.ne.s32.totalorder %s140, %s142
      %p146 = scmp.eq.s32.totalorder %s22, 0
      %p147 = por %p145, %p146
      %p148 = scmp.ne.s32.totalorder %s140, %s142
      %p149 = scmp.eq.s32.totalorder %s27, 1
      %p150 = por %p148, %p149
      %p151 = scmp.ne.s32.totalorder %s142, %s143
      %p152 = scmp.eq.s32.totalorder %s27, 0
      %p153 = por %p151, %p152
      %p154 = scmp.ne.s32.totalorder %s142, %s143
      %p155 = scmp.eq.s32.totalorder %s28, 1
      %p156 = por %p154, %p155
      %p158 = scmp.ne.s32.totalorder %s143, %s157
      %p159 = scmp.eq.s32.totalorder %s28, 0
      %p160 = por %p158, %p159
      %s162 = sadd.s32 %s161, 1
      %p165 = scmp.eq.s32.totalorder %s22, 1
      %p166 = scmp.ne.s32.totalorder %s161, %s163
      %p167 = scmp.eq.s32.totalorder %s22, 0
      %p168 = por %p166, %p167
      %p169 = scmp.ne.s32.totalorder %s161, %s163
      %p170 = scmp.eq.s32.totalorder %s27, 1
      %p171 = por %p169, %p170
      %p172 = scmp.ne.s32.totalorder %s163, %s164
      %p173 = scmp.eq.s32.totalorder %s27, 0
      %p174 = por %p172, %p173
      %p175 = scmp.ne.s32.totalorder %s163, %s164
      %p176 = scmp.eq.s32.totalorder %s28, 1
      %p177 = por %p175, %p176
      %p179 = scmp.ne.s32.totalorder %s164, %s178
      %p180 = scmp.eq.s32.totalorder %s28, 0
      %p181 = por %p179, %p180
      %s183 = sadd.s32 %s182, 1
      %p186 = scmp.eq.s32.totalorder %s22, 1
      %p187 = scmp.ne.s32.totalorder %s182, %s184
      %p188 = scmp.eq.s32.totalorder %s22, 0
      %p189 = por %p187, %p188
      %p190 = scmp.ne.s32.totalorder %s182, %s184
      %p191 = scmp.eq.s32.totalorder %s27, 1
      %p192 = por %p190, %p191
      %p193 = scmp.ne.s32.totalorder %s184, %s185
      %p194 = scmp.eq.s32.totalorder %s27, 0
      %p195 = por %p193, %p194
      %p196 = scmp.ne.s32.totalorder %s184, %s185
      %p197 = scmp.eq.s32.totalorder %s28, 1
      %p198 = por %p196, %p197
      %p200 = scmp.ne.s32.totalorder %s185, %s199
      %p201 = scmp.eq.s32.totalorder %s28, 0
      %p202 = por %p200, %p201
      %s203 = ssub.s32 %s22, %s29
      %p204 = scmp.eq.s32.totalorder %s203, 0
      %s206 = sadd.s32 %s205, 1
      %s207 = scalar_select %p204, %s205, %s206
      %p210 = pneg %p204
      %p211 = scmp.eq.s32.totalorder %s22, 1
      %p212 = por %p210, %p211
      %p213 = scmp.ne.s32.totalorder %s205, %s208
      %p214 = scmp.eq.s32.totalorder %s22, 0
      %p215 = por %p213, %p214
      %p216 = scmp.ne.s32.totalorder %s205, %s208
      %p217 = scmp.eq.s32.totalorder %s27, 1
      %p218 = por %p216, %p217
      %p219 = scmp.ne.s32.totalorder %s208, %s209
      %p220 = scmp.eq.s32.totalorder %s27, 0
      %p221 = por %p219, %p220
      %p222 = scmp.ne.s32.totalorder %s208, %s209
      %p223 = scmp.eq.s32.totalorder %s28, 1
      %p224 = por %p222, %p223
      %p226 = scmp.ne.s32.totalorder %s209, %s225
      %p227 = scmp.eq.s32.totalorder %s28, 0
      %p228 = por %p226, %p227
      %p229 = scmp.le.s32.totalorder 1, %s22
      %p230 = scmp.lt.s32.totalorder %s22, 3
      %p231 = pnand %p229, %p230
      %p232 = pneg %p231
      // Predicated region
      $region9: #{tpu_custom_call.1} parent=5 // pred_check
        _
      $region10: #{tpu_custom_call.1} parent=5 // pred_check_branch
        %234 = sbr.rel (%p231) target = $region12
      $region11: #{tpu_custom_call.1} parent=5 // pred_region
        %s235 = ssub.s32 %s22, 1
        // Predicated region
        $region13: #{tpu_custom_call.1} parent=11 // pred_check
          %p236 = pneg %p69
        $region14: #{tpu_custom_call.1} parent=11 // pred_check_branch
          %238 = sbr.rel (%p236) target = $region16
        $region15: #{tpu_custom_call.1} parent=11 // pred_region
          _
        $region16: #{tpu_custom_call.1} parent=11 // pred_fallthru
          _
        // Predicated region
        $region17: #{tpu_custom_call.1} parent=11 // pred_check
          %p239 = pneg %p90
        $region18: #{tpu_custom_call.1} parent=11 // pred_check_branch
          %241 = sbr.rel (%p239) target = $region20
        $region19: #{tpu_custom_call.1} parent=11 // pred_region
          _
        $region20: #{tpu_custom_call.1} parent=11 // pred_fallthru
          _
        // Predicated region
        $region21: #{tpu_custom_call.1} parent=11 // pred_check
          %p242 = pneg %p111
        $region22: #{tpu_custom_call.1} parent=11 // pred_check_branch
          %244 = sbr.rel (%p242) target = $region24
        $region23: #{tpu_custom_call.1} parent=11 // pred_region
          %s246 = ssub.s32 512, 512
          %247 = vsyncadd [#allocation6], %s246
          %s248 = sshll.u32 [#allocation5], 4
          %s249 = int_to_ptr.vmem [resolvable:$true] %s248
          %254 = dma.hbm_to_vmem [thread:$0]  %s3, 512, %s249, [#allocation6], 128, 128, 8
        $region24: #{tpu_custom_call.1} parent=11 // pred_fallthru
          _
        // Predicated region
        $region25: #{tpu_custom_call.1} parent=11 // pred_check
          %p255 = pneg %p132
        $region26: #{tpu_custom_call.1} parent=11 // pred_check_branch
          %257 = sbr.rel (%p255) target = $region28
        $region27: #{tpu_custom_call.1} parent=11 // pred_region
          %s259 = ssub.s32 512, 512
          %260 = vsyncadd [#allocation6], %s259
          %s261 = sshll.u32 [#allocation7], 4
          %s262 = int_to_ptr.vmem [resolvable:$true] %s261
          %267 = dma.hbm_to_vmem [thread:$0]  %s4, 512, %s262, [#allocation6], 128, 128, 8
        $region28: #{tpu_custom_call.1} parent=11 // pred_fallthru
          _
        // Predicated region
        $region29: #{tpu_custom_call.1} parent=11 // pred_check
          %p268 = pneg %p153
        $region30: #{tpu_custom_call.1} parent=11 // pred_check_branch
          %270 = sbr.rel (%p268) target = $region32
        $region31: #{tpu_custom_call.1} parent=11 // pred_region
          %s272 = ssub.s32 512, 512
          %273 = vsyncadd [#allocation9], %s272
          %s274 = sshll.u32 [#allocation8], 4
          %s275 = int_to_ptr.vmem [resolvable:$true] %s274
          %280 = dma.hbm_to_vmem [thread:$0]  %s5, 512, %s275, [#allocation9], 128, 128, 8
        $region32: #{tpu_custom_call.1} parent=11 // pred_fallthru
          _
        // Predicated region
        $region33: #{tpu_custom_call.1} parent=11 // pred_check
          %p281 = pneg %p174
        $region34: #{tpu_custom_call.1} parent=11 // pred_check_branch
          %283 = sbr.rel (%p281) target = $region36
        $region35: #{tpu_custom_call.1} parent=11 // pred_region
          %s285 = ssub.s32 512, 512
          %286 = vsyncadd [#allocation9], %s285
          %s287 = sshll.u32 [#allocation10], 4
          %s288 = int_to_ptr.vmem [resolvable:$true] %s287
          %293 = dma.hbm_to_vmem [thread:$0]  %s6, 512, %s288, [#allocation9], 128, 128, 8
        $region36: #{tpu_custom_call.1} parent=11 // pred_fallthru
          _
        // Predicated region
        $region37: #{tpu_custom_call.1} parent=11 // pred_check
          %p294 = pneg %p195
        $region38: #{tpu_custom_call.1} parent=11 // pred_check_branch
          %296 = sbr.rel (%p294) target = $region40
        $region39: #{tpu_custom_call.1} parent=11 // pred_region
          _
        $region40: #{tpu_custom_call.1} parent=11 // pred_fallthru
          _
      $region12: #{tpu_custom_call.1} parent=5 // pred_fallthru
        _
      %p297 = scmp.lt.s32.totalorder %s22, 2
      // Predicated region
      $region41: #{tpu_custom_call.1} parent=5 // pred_check
        %p298 = pneg %p297
      $region42: #{tpu_custom_call.1} parent=5 // pred_check_branch
        %300 = sbr.rel (%p298) target = $region44
      $region43: #{tpu_custom_call.1} parent=5 // pred_region
        // Predicated region
        $region45: #{tpu_custom_call.1} parent=43 // pred_check
          %p301 = pneg %p42
        $region46: #{tpu_custom_call.1} parent=43 // pred_check_branch
          %303 = sbr.rel (%p301) target = $region48
        $region47: #{tpu_custom_call.1} parent=43 // pred_region
          %s304 = sand.u32 %s32, 1
          %s305 = scalar_lea.sflag [#allocation3], %s304
          %s306 = sand.u32 %s32, 1
          %s307 = smul.addr %s306, 8
          %s308 = scalar_lea.vmem [#allocation2], %s307
          %s310 = ssub.s32 128, 128
          %311 = vsyncadd %s305, %s310
          %s312 = smul.addr %s22, 128
          %s313 = scalar_lea.hbm %s0, %s312
          %s315 = sshll.u32 %s308, 4
          %s316 = int_to_ptr.vmem [resolvable:$true] %s315
          %318 = dma.hbm_to_vmem [thread:$0]  %s313, 128, %s316, %s305
        $region48: #{tpu_custom_call.1} parent=43 // pred_fallthru
          _
      $region44: #{tpu_custom_call.1} parent=5 // pred_fallthru
        _
      %p319 = scmp.le.s32.totalorder 1, %s22
      %p320 = scmp.lt.s32.totalorder %s22, 3
      %p321 = pnand %p319, %p320
      %p322 = pneg %p321
      // Predicated region
      $region49: #{tpu_custom_call.1} parent=5 // pred_check
        _
      $region50: #{tpu_custom_call.1} parent=5 // pred_check_branch
        %324 = sbr.rel (%p321) target = $region52
      $region51: #{tpu_custom_call.1} parent=5 // pred_region
        %s325 = ssub.s32 %s22, 1
        %s326 = sand.u32 %s35, 1
        %s327 = scalar_lea.sflag [#allocation3], %s326
        %s328 = sand.u32 %s35, 1
        %s329 = smul.addr %s328, 8
        %s330 = scalar_lea.vmem [#allocation2], %s329
        // Predicated region
        $region53: #{tpu_custom_call.1} parent=51 // pred_check
          %p331 = pneg %p48
        $region54: #{tpu_custom_call.1} parent=51 // pred_check_branch
          %333 = sbr.rel (%p331) target = $region56
        $region55: #{tpu_custom_call.1} parent=51 // pred_region
          %334 = dma.done %s327, 128
        $region56: #{tpu_custom_call.1} parent=51 // pred_fallthru
          _
        // Predicated region
        $region57: #{tpu_custom_call.1} parent=51 // pred_check
          %p335 = pneg %p111
        $region58: #{tpu_custom_call.1} parent=51 // pred_check_branch
          %337 = sbr.rel (%p335) target = $region60
        $region59: #{tpu_custom_call.1} parent=51 // pred_region
          %338 = dma.done [#allocation6], 512
        $region60: #{tpu_custom_call.1} parent=51 // pred_fallthru
          _
        // Predicated region
        $region61: #{tpu_custom_call.1} parent=51 // pred_check
          %p339 = pneg %p132
        $region62: #{tpu_custom_call.1} parent=51 // pred_check_branch
          %341 = sbr.rel (%p339) target = $region64
        $region63: #{tpu_custom_call.1} parent=51 // pred_region
          %342 = dma.done [#allocation6], 512
        $region64: #{tpu_custom_call.1} parent=51 // pred_fallthru
          _
        // Predicated region
        $region65: #{tpu_custom_call.1} parent=51 // pred_check
          %p343 = pneg %p153
        $region66: #{tpu_custom_call.1} parent=51 // pred_check_branch
          %345 = sbr.rel (%p343) target = $region68
        $region67: #{tpu_custom_call.1} parent=51 // pred_region
          %346 = dma.done [#allocation9], 512
        $region68: #{tpu_custom_call.1} parent=51 // pred_fallthru
          _
        // Predicated region
        $region69: #{tpu_custom_call.1} parent=51 // pred_check
          %p347 = pneg %p174
        $region70: #{tpu_custom_call.1} parent=51 // pred_check_branch
          %349 = sbr.rel (%p347) target = $region72
        $region71: #{tpu_custom_call.1} parent=51 // pred_region
          %350 = dma.done [#allocation9], 512
        $region72: #{tpu_custom_call.1} parent=51 // pred_fallthru
          _
        %s351 = sand.u32 %s35, 1
        %s352 = scalar_lea.sflag [#allocation3], %s351
        %s353 = sand.u32 %s35, 1
        %s354 = smul.addr %s353, 8
        %s355 = scalar_lea.vmem [#allocation2], %s354
        %p356 = pneg %p48
        %p357 = pneg %p45
        %p358 = pneg %p69
        %p359 = pneg %p66
        %p360 = pneg %p90
        %p361 = pneg %p87
        %p362 = pneg %p111
        %p363 = pneg %p108
        %p364 = pneg %p132
        %p365 = pneg %p129
        %p366 = pneg %p153
        %p367 = pneg %p150
        %p368 = pneg %p174
        %p369 = pneg %p171
        %p370 = pneg %p195
        %p371 = pneg %p192
        %p372 = pneg %p221
        %p373 = pneg %p218
        %s374 = sand.u32 %s208, 1
        %s375 = scalar_lea.sflag [#allocation4], %s374
        %s376 = sand.u32 %s208, 1
        %s377 = smul.addr %s376, 8
        %s378 = scalar_lea.vmem [#allocation11], %s377
        %v379 = vld [vmem:[%s330] sm:$0xff]
        %v380 = vld [vmem:[%s1] sm:$0x1]
        %v381 = vld [vmem:[%s2] sm:$0x1]
        %vm382 = vcmask 261120
        %v383 = vsel %vm382, %v379, 0.0
        %384 = vadd.xlane.f32.xlu0 %v383
        %v385 = vpop.xlane.xlu0 %384
        %v386 = vrcp.pop 32.0
        %v387 = vmul.f32 %v385, %v386
        %v388 = vsub.f32 %v379, %v387
        %v389 = vmul.f32 %v388, %v388
        %v390 = vsel %vm382, %v389, 0.0
        %391 = vadd.xlane.f32.xlu0 %v390
        %v392 = vpop.xlane.xlu0 %391
        %v393 = vmul.f32 %v392, %v386
        %v394 = vadd.f32 %v393, 1e-05
        %v395 = vrsqrt.pop %v394
        %v396 = vmul.f32 %v388, %v395
        %v398 = vlaneseq
        %v399 = vshrl.u32 %v398, 7
        %v400 = vsub.s32 0, %v399
        %v401 = vrot.slane %v380, %v400
        %v403 = vmul.f32 %v396, %v401
        %v405 = vlaneseq
        %v406 = vshrl.u32 %v405, 7
        %v407 = vsub.s32 0, %v406
        %v408 = vrot.slane %v381, %v407
        %v410 = vadd.f32 %v403, %v408
        %v411 = vld [vmem:[#allocation5] sm:$0xff]
        %v412 = vld [vmem:[#allocation5 + $0x8] sm:$0xff]
        %v413 = vld [vmem:[#allocation5 + $0x10] sm:$0xff]
        %v414 = vld [vmem:[#allocation5 + $0x18] sm:$0xff]
        %v416 = vsel %vm382, %v410, 0
        %418 = vmatprep.subr.mxu0 0.0
        %419 = vmatpush1.msra.mxu0 %v411
        %420 = vmatprep.subr.mxu0 0.0
        %421 = vmatpush1.msra.mxu0 %v412
        %422 = vmatprep.subr.mxu0 0.0
        %423 = vmatpush1.msra.mxu0 %v413
        %424 = vmatprep.subr.mxu0 0.0
        %425 = vmatpush1.msra.mxu0 %v414
        %426 = vmatprep.subr.mxu0 0.0
        %427 = vmatpush1.msra.mxu0 0.0
        %428 = vmatprep.subr.mxu0 0.0
        %429 = vmatpush1.msra.mxu0 0.0
        %430 = vmatprep.subr.mxu0 0.0
        %431 = vmatpush1.msra.mxu0 0.0
        %432 = vmatprep.subr.mxu0 0.0
        %433 = vmatpush1.msra.mxu0 0.0
        %434 = vmatprep.subr.mxu0 0.0
        %435 = vmatpush1.msra.mxu0 0.0
        %436 = vmatprep.subr.mxu0 0.0
        %437 = vmatpush1.msra.mxu0 0.0
        %438 = vmatprep.subr.mxu0 0.0
        %439 = vmatpush1.msra.mxu0 0.0
        %440 = vmatprep.subr.mxu0 0.0
        %441 = vmatpush1.msra.mxu0 0.0
        %442 = vmatprep.subr.mxu0 0.0
        %443 = vmatpush1.msra.mxu0 0.0
        %444 = vmatprep.subr.mxu0 0.0
        %445 = vmatpush1.msra.mxu0 0.0
        %446 = vmatprep.subr.mxu0 0.0
        %447 = vmatpush1.msra.mxu0 0.0
        %448 = vmatprep.subr.mxu0 0.0
        %449 = vmatpush1.msra.mxu0 0.0
        %450 = vmatprep.subr.mxu0 0.0
        %451 = vmatpush1.msra.mxu0 0.0
        %452 = vmatprep.subr.mxu0 0.0
        %453 = vmatpush1.msra.mxu0 0.0
        %454 = vmatprep.subr.mxu0 0.0
        %455 = vmatpush1.msra.mxu0 0.0
        %456 = vmatprep.subr.mxu0 0.0
        %457 = vmatpush1.msra.mxu0 0.0
        %458 = vmatprep.subr.mxu0 0.0
        %459 = vmatpush1.msra.mxu0 0.0
        %460 = vmatprep.subr.mxu0 0.0
        %461 = vmatpush1.msra.mxu0 0.0
        %462 = vmatprep.subr.mxu0 0.0
        %463 = vmatpush1.msra.mxu0 0.0
        %464 = vmatprep.subr.mxu0 0.0
        %465 = vmatpush1.msra.mxu0 0.0
        %466 = vmatprep.subr.mxu0 0.0
        %467 = vmatpush1.msra.mxu0 0.0
        %468 = vmatprep.subr.mxu0 0.0
        %469 = vmatpush1.msra.mxu0 0.0
        %470 = vmatprep.subr.mxu0 0.0
        %471 = vmatpush1.msra.mxu0 0.0
        %472 = vmatprep.subr.mxu0 0.0
        %473 = vmatpush1.msra.mxu0 0.0
        %474 = vmatprep.subr.mxu0 0.0
        %475 = vmatpush1.msra.mxu0 0.0
        %476 = vmatprep.subr.mxu0 0.0
        %477 = vmatpush1.msra.mxu0 0.0
        %478 = vmatprep.subr.mxu0 0.0
        %479 = vmatpush1.msra.mxu0 0.0
        %480 = vmatprep.subr.mxu0 0.0
        %481 = vmatpush1.msra.mxu0 0.0
        %482 = vmatprep.mubr.f32.mxu0 0.0
        %483 = vmatmul.mubr.f32.gmra.mrb[0].mxu0 %v416
        %v484 = vpop.f32.mrb[0].mxu0
        %v485 = vadd.f32 0.0, %v484
        %v486 = vpop.f32.mrb[0].mxu0
        %487 = vdwg.mxu0
        %v488 = vld [vmem:[#allocation7] sm:$0xff]
        %v489 = vld [vmem:[#allocation7 + $0x8] sm:$0xff]
        %v490 = vld [vmem:[#allocation7 + $0x10] sm:$0xff]
        %v491 = vld [vmem:[#allocation7 + $0x18] sm:$0xff]
        %492 = vmatprep.subr.mxu0 0.0
        %493 = vmatpush1.msra.mxu0 %v488
        %494 = vmatprep.subr.mxu0 0.0
        %495 = vmatpush1.msra.mxu0 %v489
        %496 = vmatprep.subr.mxu0 0.0
        %497 = vmatpush1.msra.mxu0 %v490
        %498 = vmatprep.subr.mxu0 0.0
        %499 = vmatpush1.msra.mxu0 %v491
        %500 = vmatprep.subr.mxu0 0.0
        %501 = vmatpush1.msra.mxu0 0.0
        %502 = vmatprep.subr.mxu0 0.0
        %503 = vmatpush1.msra.mxu0 0.0
        %504 = vmatprep.subr.mxu0 0.0
        %505 = vmatpush1.msra.mxu0 0.0
        %506 = vmatprep.subr.mxu0 0.0
        %507 = vmatpush1.msra.mxu0 0.0
        %508 = vmatprep.subr.mxu0 0.0
        %509 = vmatpush1.msra.mxu0 0.0
        %510 = vmatprep.subr.mxu0 0.0
        %511 = vmatpush1.msra.mxu0 0.0
        %512 = vmatprep.subr.mxu0 0.0
        %513 = vmatpush1.msra.mxu0 0.0
        %514 = vmatprep.subr.mxu0 0.0
        %515 = vmatpush1.msra.mxu0 0.0
        %516 = vmatprep.subr.mxu0 0.0
        %517 = vmatpush1.msra.mxu0 0.0
        %518 = vmatprep.subr.mxu0 0.0
        %519 = vmatpush1.msra.mxu0 0.0
        %520 = vmatprep.subr.mxu0 0.0
        %521 = vmatpush1.msra.mxu0 0.0
        %522 = vmatprep.subr.mxu0 0.0
        %523 = vmatpush1.msra.mxu0 0.0
        %524 = vmatprep.subr.mxu0 0.0
        %525 = vmatpush1.msra.mxu0 0.0
        %526 = vmatprep.subr.mxu0 0.0
        %527 = vmatpush1.msra.mxu0 0.0
        %528 = vmatprep.subr.mxu0 0.0
        %529 = vmatpush1.msra.mxu0 0.0
        %530 = vmatprep.subr.mxu0 0.0
        %531 = vmatpush1.msra.mxu0 0.0
        %532 = vmatprep.subr.mxu0 0.0
        %533 = vmatpush1.msra.mxu0 0.0
        %534 = vmatprep.subr.mxu0 0.0
        %535 = vmatpush1.msra.mxu0 0.0
        %536 = vmatprep.subr.mxu0 0.0
        %537 = vmatpush1.msra.mxu0 0.0
        %538 = vmatprep.subr.mxu0 0.0
        %539 = vmatpush1.msra.mxu0 0.0
        %540 = vmatprep.subr.mxu0 0.0
        %541 = vmatpush1.msra.mxu0 0.0
        %542 = vmatprep.subr.mxu0 0.0
        %543 = vmatpush1.msra.mxu0 0.0
        %544 = vmatprep.subr.mxu0 0.0
        %545 = vmatpush1.msra.mxu0 0.0
        %546 = vmatprep.subr.mxu0 0.0
        %547 = vmatpush1.msra.mxu0 0.0
        %548 = vmatprep.subr.mxu0 0.0
        %549 = vmatpush1.msra.mxu0 0.0
        %550 = vmatprep.subr.mxu0 0.0
        %551 = vmatpush1.msra.mxu0 0.0
        %552 = vmatprep.subr.mxu0 0.0
        %553 = vmatpush1.msra.mxu0 0.0
        %554 = vmatprep.subr.mxu0 0.0
        %555 = vmatpush1.msra.mxu0 0.0
        %556 = vmatprep.mubr.f32.mxu0 0.0
        %557 = vmatmul.mubr.f32.gmra.mrb[0].mxu0 %v416
        %v558 = vpop.f32.mrb[0].mxu0
        %v559 = vadd.f32 0.0, %v558
        %v560 = vpop.f32.mrb[0].mxu0
        %561 = vdwg.mxu0
        %v562 = vld [vmem:[#allocation8] sm:$0xff]
        %v563 = vld [vmem:[#allocation8 + $0x8] sm:$0xff]
        %v564 = vld [vmem:[#allocation8 + $0x10] sm:$0xff]
        %v565 = vld [vmem:[#allocation8 + $0x18] sm:$0xff]
        %566 = vmatprep.subr.mxu0 0.0
        %567 = vmatpush1.msra.mxu0 %v562
        %568 = vmatprep.subr.mxu0 0.0
        %569 = vmatpush1.msra.mxu0 %v563
        %570 = vmatprep.subr.mxu0 0.0
        %571 = vmatpush1.msra.mxu0 %v564
        %572 = vmatprep.subr.mxu0 0.0
        %573 = vmatpush1.msra.mxu0 %v565
        %574 = vmatprep.subr.mxu0 0.0
        %575 = vmatpush1.msra.mxu0 0.0
        %576 = vmatprep.subr.mxu0 0.0
        %577 = vmatpush1.msra.mxu0 0.0
        %578 = vmatprep.subr.mxu0 0.0
        %579 = vmatpush1.msra.mxu0 0.0
        %580 = vmatprep.subr.mxu0 0.0
        %581 = vmatpush1.msra.mxu0 0.0
        %582 = vmatprep.subr.mxu0 0.0
        %583 = vmatpush1.msra.mxu0 0.0
        %584 = vmatprep.subr.mxu0 0.0
        %585 = vmatpush1.msra.mxu0 0.0
        %586 = vmatprep.subr.mxu0 0.0
        %587 = vmatpush1.msra.mxu0 0.0
        %588 = vmatprep.subr.mxu0 0.0
        %589 = vmatpush1.msra.mxu0 0.0
        %590 = vmatprep.subr.mxu0 0.0
        %591 = vmatpush1.msra.mxu0 0.0
        %592 = vmatprep.subr.mxu0 0.0
        %593 = vmatpush1.msra.mxu0 0.0
        %594 = vmatprep.subr.mxu0 0.0
        %595 = vmatpush1.msra.mxu0 0.0
        %596 = vmatprep.subr.mxu0 0.0
        %597 = vmatpush1.msra.mxu0 0.0
        %598 = vmatprep.subr.mxu0 0.0
        %599 = vmatpush1.msra.mxu0 0.0
        %600 = vmatprep.subr.mxu0 0.0
        %601 = vmatpush1.msra.mxu0 0.0
        %602 = vmatprep.subr.mxu0 0.0
        %603 = vmatpush1.msra.mxu0 0.0
        %604 = vmatprep.subr.mxu0 0.0
        %605 = vmatpush1.msra.mxu0 0.0
        %606 = vmatprep.subr.mxu0 0.0
        %607 = vmatpush1.msra.mxu0 0.0
        %608 = vmatprep.subr.mxu0 0.0
        %609 = vmatpush1.msra.mxu0 0.0
        %610 = vmatprep.subr.mxu0 0.0
        %611 = vmatpush1.msra.mxu0 0.0
        %612 = vmatprep.subr.mxu0 0.0
        %613 = vmatpush1.msra.mxu0 0.0
        %614 = vmatprep.subr.mxu0 0.0
        %615 = vmatpush1.msra.mxu0 0.0
        %616 = vmatprep.subr.mxu0 0.0
        %617 = vmatpush1.msra.mxu0 0.0
        %618 = vmatprep.subr.mxu0 0.0
        %619 = vmatpush1.msra.mxu0 0.0
        %620 = vmatprep.subr.mxu0 0.0
        %621 = vmatpush1.msra.mxu0 0.0
        %622 = vmatprep.subr.mxu0 0.0
        %623 = vmatpush1.msra.mxu0 0.0
        %624 = vmatprep.subr.mxu0 0.0
        %625 = vmatpush1.msra.mxu0 0.0
        %626 = vmatprep.subr.mxu0 0.0
        %627 = vmatpush1.msra.mxu0 0.0
        %628 = vmatprep.subr.mxu0 0.0
        %629 = vmatpush1.msra.mxu0 0.0
        %630 = vmatprep.mubr.f32.mxu0 0.0
        %631 = vmatmul.mubr.f32.gmra.mrb[0].mxu0 %v416
        %v632 = vpop.f32.mrb[0].mxu0
        %v633 = vadd.f32 0.0, %v632
        %v634 = vpop.f32.mrb[0].mxu0
        %635 = vdwg.mxu0
        %v636 = vlaneseq
        %v637 = vshrl.u32 %v636, 7
        %v638 = vlaneseq
        %v639 = vand.u32 %v638, 127
        %vm640 = vcmp.le.s32.totalorder %v639, %v637
        %v641 = vld [vmem:[#allocation10] sm:$0xff]
        %v642 = vld [vmem:[#allocation10 + $0x8] sm:$0xff]
        %v643 = vld [vmem:[#allocation10 + $0x10] sm:$0xff]
        %v644 = vld [vmem:[#allocation10 + $0x18] sm:$0xff]
        %v645 = vld [vmem:[%s7] sm:$0x1]
        %v647 = vlaneseq
        %v648 = vshrl.u32 %v647, 7
        %v649 = vsub.s32 0, %v648
        %v650 = vrot.slane %v645, %v649
        %v652 = vadd.f32 %v650, 0.0
        %vm653 = vcmask 64512
        %v655 = vsel %vm653, %v485, 0
        %v658 = vsel %vm653, %v559, 0
        %660 = vmatprep.subr.mxu0 0.0
        %661 = vmatpush1.xpose.msra.mxu0 %v658
        %662 = vmatprep.subr.mxu0 0.0
        %663 = vmatpush1.xpose.msra.mxu0 0.0
        %664 = vmatprep.subr.mxu0 0.0
        %665 = vmatpush1.xpose.msra.mxu0 0.0
        %666 = vmatprep.subr.mxu0 0.0
        %667 = vmatpush1.xpose.msra.mxu0 0.0
        %668 = vmatprep.subr.mxu0 0.0
        %669 = vmatpush1.xpose.msra.mxu0 0.0
        %670 = vmatprep.subr.mxu0 0.0
        %671 = vmatpush1.xpose.msra.mxu0 0.0
        %672 = vmatprep.subr.mxu0 0.0
        %673 = vmatpush1.xpose.msra.mxu0 0.0
        %674 = vmatprep.subr.mxu0 0.0
        %675 = vmatpush1.xpose.msra.mxu0 0.0
        %676 = vmatprep.subr.mxu0 0.0
        %677 = vmatpush1.xpose.msra.mxu0 0.0
        %678 = vmatprep.subr.mxu0 0.0
        %679 = vmatpush1.xpose.msra.mxu0 0.0
        %680 = vmatprep.subr.mxu0 0.0
        %681 = vmatpush1.xpose.msra.mxu0 0.0
        %682 = vmatprep.subr.mxu0 0.0
        %683 = vmatpush1.xpose.msra.mxu0 0.0
        %684 = vmatprep.subr.mxu0 0.0
        %685 = vmatpush1.xpose.msra.mxu0 0.0
        %686 = vmatprep.subr.mxu0 0.0
        %687 = vmatpush1.xpose.msra.mxu0 0.0
        %688 = vmatprep.subr.mxu0 0.0
        %689 = vmatpush1.xpose.msra.mxu0 0.0
        %690 = vmatprep.subr.mxu0 0.0
        %691 = vmatpush1.xpose.msra.mxu0 0.0
        %692 = vmatprep.subr.mxu0 0.0
        %693 = vmatpush1.xpose.msra.mxu0 0.0
        %694 = vmatprep.subr.mxu0 0.0
        %695 = vmatpush1.xpose.msra.mxu0 0.0
        %696 = vmatprep.subr.mxu0 0.0
        %697 = vmatpush1.xpose.msra.mxu0 0.0
        %698 = vmatprep.subr.mxu0 0.0
        %699 = vmatpush1.xpose.msra.mxu0 0.0
        %700 = vmatprep.subr.mxu0 0.0
        %701 = vmatpush1.xpose.msra.mxu0 0.0
        %702 = vmatprep.subr.mxu0 0.0
        %703 = vmatpush1.xpose.msra.mxu0 0.0
        %704 = vmatprep.subr.mxu0 0.0
        %705 = vmatpush1.xpose.msra.mxu0 0.0
        %706 = vmatprep.subr.mxu0 0.0
        %707 = vmatpush1.xpose.msra.mxu0 0.0
        %708 = vmatprep.subr.mxu0 0.0
        %709 = vmatpush1.xpose.msra.mxu0 0.0
        %710 = vmatprep.subr.mxu0 0.0
        %711 = vmatpush1.xpose.msra.mxu0 0.0
        %712 = vmatprep.subr.mxu0 0.0
        %713 = vmatpush1.xpose.msra.mxu0 0.0
        %714 = vmatprep.subr.mxu0 0.0
        %715 = vmatpush1.xpose.msra.mxu0 0.0
        %716 = vmatprep.subr.mxu0 0.0
        %717 = vmatpush1.xpose.msra.mxu0 0.0
        %718 = vmatprep.subr.mxu0 0.0
        %719 = vmatpush1.xpose.msra.mxu0 0.0
        %720 = vmatprep.subr.mxu0 0.0
        %721 = vmatpush1.xpose.msra.mxu0 0.0
        %722 = vmatprep.subr.mxu0 0.0
        %723 = vmatpush1.xpose.msra.mxu0 0.0
        %724 = vmatprep.mubr.f32.mxu0 0.0
        %725 = vmatmul.mubr.f32.gmra.mrb[0].mxu0 %v655
        %v726 = vpop.f32.mrb[0].mxu0
        %v727 = vadd.f32 0.0, %v726
        %v728 = vpop.f32.mrb[0].mxu0
        %729 = vdwg.mxu0
        %v730 = vmul.f32 %v727, 0.35355338
        %v731 = vsel %vm640, %v730, -1e+30
        %v732 = vsel %vm653, %v731, -inf
        %733 = vmax.xlane.f32.xlu0 %v732
        %v734 = vpop.xlane.xlu0 %733
        %v735 = vsub.f32 %v731, %v734
        %v736 = vmul.f32 %v735, 1.442695
        %v737 = vpow.pop %v736
        %v738 = vsel %vm653, %v737, 0.0
        %739 = vadd.xlane.f32.xlu0 %v738
        %v740 = vpop.xlane.xlu0 %739
        %v741 = vrcp.pop %v740
        %v742 = vmul.f32 %v737, %v741
        %v744 = vsel %vm653, %v742, 0
        %746 = vmatprep.subr.mxu0 0.0
        %747 = vmatpush1.msra.mxu0 %v633
        %748 = vmatprep.subr.mxu0 0.0
        %749 = vmatpush1.msra.mxu0 0.0
        %750 = vmatprep.subr.mxu0 0.0
        %751 = vmatpush1.msra.mxu0 0.0
        %752 = vmatprep.subr.mxu0 0.0
        %753 = vmatpush1.msra.mxu0 0.0
        %754 = vmatprep.subr.mxu0 0.0
        %755 = vmatpush1.msra.mxu0 0.0
        %756 = vmatprep.subr.mxu0 0.0
        %757 = vmatpush1.msra.mxu0 0.0
        %758 = vmatprep.subr.mxu0 0.0
        %759 = vmatpush1.msra.mxu0 0.0
        %760 = vmatprep.subr.mxu0 0.0
        %761 = vmatpush1.msra.mxu0 0.0
        %762 = vmatprep.subr.mxu0 0.0
        %763 = vmatpush1.msra.mxu0 0.0
        %764 = vmatprep.subr.mxu0 0.0
        %765 = vmatpush1.msra.mxu0 0.0
        %766 = vmatprep.subr.mxu0 0.0
        %767 = vmatpush1.msra.mxu0 0.0
        %768 = vmatprep.subr.mxu0 0.0
        %769 = vmatpush1.msra.mxu0 0.0
        %770 = vmatprep.subr.mxu0 0.0
        %771 = vmatpush1.msra.mxu0 0.0
        %772 = vmatprep.subr.mxu0 0.0
        %773 = vmatpush1.msra.mxu0 0.0
        %774 = vmatprep.subr.mxu0 0.0
        %775 = vmatpush1.msra.mxu0 0.0
        %776 = vmatprep.subr.mxu0 0.0
        %777 = vmatpush1.msra.mxu0 0.0
        %778 = vmatprep.subr.mxu0 0.0
        %779 = vmatpush1.msra.mxu0 0.0
        %780 = vmatprep.subr.mxu0 0.0
        %781 = vmatpush1.msra.mxu0 0.0
        %782 = vmatprep.subr.mxu0 0.0
        %783 = vmatpush1.msra.mxu0 0.0
        %784 = vmatprep.subr.mxu0 0.0
        %785 = vmatpush1.msra.mxu0 0.0
        %786 = vmatprep.subr.mxu0 0.0
        %787 = vmatpush1.msra.mxu0 0.0
        %788 = vmatprep.subr.mxu0 0.0
        %789 = vmatpush1.msra.mxu0 0.0
        %790 = vmatprep.subr.mxu0 0.0
        %791 = vmatpush1.msra.mxu0 0.0
        %792 = vmatprep.subr.mxu0 0.0
        %793 = vmatpush1.msra.mxu0 0.0
        %794 = vmatprep.subr.mxu0 0.0
        %795 = vmatpush1.msra.mxu0 0.0
        %796 = vmatprep.subr.mxu0 0.0
        %797 = vmatpush1.msra.mxu0 0.0
        %798 = vmatprep.subr.mxu0 0.0
        %799 = vmatpush1.msra.mxu0 0.0
        %800 = vmatprep.subr.mxu0 0.0
        %801 = vmatpush1.msra.mxu0 0.0
        %802 = vmatprep.subr.mxu0 0.0
        %803 = vmatpush1.msra.mxu0 0.0
        %804 = vmatprep.subr.mxu0 0.0
        %805 = vmatpush1.msra.mxu0 0.0
        %806 = vmatprep.subr.mxu0 0.0
        %807 = vmatpush1.msra.mxu0 0.0
        %808 = vmatprep.subr.mxu0 0.0
        %809 = vmatpush1.msra.mxu0 0.0
        %810 = vmatprep.mubr.f32.mxu0 0.0
        %811 = vmatmul.mubr.f32.gmra.mrb[0].mxu0 %v744
        %v812 = vpop.f32.mrb[0].mxu0
        %v813 = vadd.f32 0.0, %v812
        %v814 = vpop.f32.mrb[0].mxu0
        %815 = vdwg.mxu0
        %v817 = vsel %vm653, %v813, 0
        %819 = vmatprep.subr.mxu0 0.0
        %820 = vmatpush1.msra.mxu0 %v641
        %821 = vmatprep.subr.mxu0 0.0
        %822 = vmatpush1.msra.mxu0 0.0
        %823 = vmatprep.subr.mxu0 0.0
        %824 = vmatpush1.msra.mxu0 0.0
        %825 = vmatprep.subr.mxu0 0.0
        %826 = vmatpush1.msra.mxu0 0.0
        %827 = vmatprep.subr.mxu0 0.0
        %828 = vmatpush1.msra.mxu0 0.0
        %829 = vmatprep.subr.mxu0 0.0
        %830 = vmatpush1.msra.mxu0 0.0
        %831 = vmatprep.subr.mxu0 0.0
        %832 = vmatpush1.msra.mxu0 0.0
        %833 = vmatprep.subr.mxu0 0.0
        %834 = vmatpush1.msra.mxu0 0.0
        %835 = vmatprep.subr.mxu0 0.0
        %836 = vmatpush1.msra.mxu0 0.0
        %837 = vmatprep.subr.mxu0 0.0
        %838 = vmatpush1.msra.mxu0 0.0
        %839 = vmatprep.subr.mxu0 0.0
        %840 = vmatpush1.msra.mxu0 0.0
        %841 = vmatprep.subr.mxu0 0.0
        %842 = vmatpush1.msra.mxu0 0.0
        %843 = vmatprep.subr.mxu0 0.0
        %844 = vmatpush1.msra.mxu0 0.0
        %845 = vmatprep.subr.mxu0 0.0
        %846 = vmatpush1.msra.mxu0 0.0
        %847 = vmatprep.subr.mxu0 0.0
        %848 = vmatpush1.msra.mxu0 0.0
        %849 = vmatprep.subr.mxu0 0.0
        %850 = vmatpush1.msra.mxu0 0.0
        %851 = vmatprep.subr.mxu0 0.0
        %852 = vmatpush1.msra.mxu0 0.0
        %853 = vmatprep.subr.mxu0 0.0
        %854 = vmatpush1.msra.mxu0 0.0
        %855 = vmatprep.subr.mxu0 0.0
        %856 = vmatpush1.msra.mxu0 0.0
        %857 = vmatprep.subr.mxu0 0.0
        %858 = vmatpush1.msra.mxu0 0.0
        %859 = vmatprep.subr.mxu0 0.0
        %860 = vmatpush1.msra.mxu0 0.0
        %861 = vmatprep.subr.mxu0 0.0
        %862 = vmatpush1.msra.mxu0 0.0
        %863 = vmatprep.subr.mxu0 0.0
        %864 = vmatpush1.msra.mxu0 0.0
        %865 = vmatprep.subr.mxu0 0.0
        %866 = vmatpush1.msra.mxu0 0.0
        %867 = vmatprep.subr.mxu0 0.0
        %868 = vmatpush1.msra.mxu0 0.0
        %869 = vmatprep.subr.mxu0 0.0
        %870 = vmatpush1.msra.mxu0 0.0
        %871 = vmatprep.subr.mxu0 0.0
        %872 = vmatpush1.msra.mxu0 0.0
        %873 = vmatprep.subr.mxu0 0.0
        %874 = vmatpush1.msra.mxu0 0.0
        %875 = vmatprep.subr.mxu0 0.0
        %876 = vmatpush1.msra.mxu0 0.0
        %877 = vmatprep.subr.mxu0 0.0
        %878 = vmatpush1.msra.mxu0 0.0
        %879 = vmatprep.subr.mxu0 0.0
        %880 = vmatpush1.msra.mxu0 0.0
        %881 = vmatprep.subr.mxu0 0.0
        %882 = vmatpush1.msra.mxu0 0.0
        %883 = vmatprep.mubr.f32.mxu0 0.0
        %884 = vmatmul.mubr.f32.gmra.mrb[0].mxu0 %v817
        %v885 = vpop.f32.mrb[0].mxu0
        %v886 = vadd.f32 0.0, %v885
        %v887 = vpop.f32.mrb[0].mxu0
        %888 = vdwg.mxu0
        %v889 = vadd.f32 %v652, %v886
        %890 = vrot.lane.b32.xlu0 %v485, 120
        %v891 = vpop.permute.xlu0 %890
        %892 = vrot.lane.b32.xlu0 %v559, 120
        %v893 = vpop.permute.xlu0 %892
        %v894 = vsel %vm653, %v891, 0
        %v896 = vsel %vm653, %v893, 0
        %898 = vmatprep.subr.mxu0 0.0
        %899 = vmatpush1.xpose.msra.mxu0 %v896
        %900 = vmatprep.subr.mxu0 0.0
        %901 = vmatpush1.xpose.msra.mxu0 0.0
        %902 = vmatprep.subr.mxu0 0.0
        %903 = vmatpush1.xpose.msra.mxu0 0.0
        %904 = vmatprep.subr.mxu0 0.0
        %905 = vmatpush1.xpose.msra.mxu0 0.0
        %906 = vmatprep.subr.mxu0 0.0
        %907 = vmatpush1.xpose.msra.mxu0 0.0
        %908 = vmatprep.subr.mxu0 0.0
        %909 = vmatpush1.xpose.msra.mxu0 0.0
        %910 = vmatprep.subr.mxu0 0.0
        %911 = vmatpush1.xpose.msra.mxu0 0.0
        %912 = vmatprep.subr.mxu0 0.0
        %913 = vmatpush1.xpose.msra.mxu0 0.0
        %914 = vmatprep.subr.mxu0 0.0
        %915 = vmatpush1.xpose.msra.mxu0 0.0
        %916 = vmatprep.subr.mxu0 0.0
        %917 = vmatpush1.xpose.msra.mxu0 0.0
        %918 = vmatprep.subr.mxu0 0.0
        %919 = vmatpush1.xpose.msra.mxu0 0.0
        %920 = vmatprep.subr.mxu0 0.0
        %921 = vmatpush1.xpose.msra.mxu0 0.0
        %922 = vmatprep.subr.mxu0 0.0
        %923 = vmatpush1.xpose.msra.mxu0 0.0
        %924 = vmatprep.subr.mxu0 0.0
        %925 = vmatpush1.xpose.msra.mxu0 0.0
        %926 = vmatprep.subr.mxu0 0.0
        %927 = vmatpush1.xpose.msra.mxu0 0.0
        %928 = vmatprep.subr.mxu0 0.0
        %929 = vmatpush1.xpose.msra.mxu0 0.0
        %930 = vmatprep.subr.mxu0 0.0
        %931 = vmatpush1.xpose.msra.mxu0 0.0
        %932 = vmatprep.subr.mxu0 0.0
        %933 = vmatpush1.xpose.msra.mxu0 0.0
        %934 = vmatprep.subr.mxu0 0.0
        %935 = vmatpush1.xpose.msra.mxu0 0.0
        %936 = vmatprep.subr.mxu0 0.0
        %937 = vmatpush1.xpose.msra.mxu0 0.0
        %938 = vmatprep.subr.mxu0 0.0
        %939 = vmatpush1.xpose.msra.mxu0 0.0
        %940 = vmatprep.subr.mxu0 0.0
        %941 = vmatpush1.xpose.msra.mxu0 0.0
        %942 = vmatprep.subr.mxu0 0.0
        %943 = vmatpush1.xpose.msra.mxu0 0.0
        %944 = vmatprep.subr.mxu0 0.0
        %945 = vmatpush1.xpose.msra.mxu0 0.0
        %946 = vmatprep.subr.mxu0 0.0
        %947 = vmatpush1.xpose.msra.mxu0 0.0
        %948 = vmatprep.subr.mxu0 0.0
        %949 = vmatpush1.xpose.msra.mxu0 0.0
        %950 = vmatprep.subr.mxu0 0.0
        %951 = vmatpush1.xpose.msra.mxu0 0.0
        %952 = vmatprep.subr.mxu0 0.0
        %953 = vmatpush1.xpose.msra.mxu0 0.0
        %954 = vmatprep.subr.mxu0 0.0
        %955 = vmatpush1.xpose.msra.mxu0 0.0
        %956 = vmatprep.subr.mxu0 0.0
        %957 = vmatpush1.xpose.msra.mxu0 0.0
        %958 = vmatprep.subr.mxu0 0.0
        %959 = vmatpush1.xpose.msra.mxu0 0.0
        %960 = vmatprep.subr.mxu0 0.0
        %961 = vmatpush1.xpose.msra.mxu0 0.0
        %962 = vmatprep.mubr.f32.mxu0 0.0
        %963 = vmatmul.mubr.f32.gmra.mrb[0].mxu0 %v894
        %v964 = vpop.f32.mrb[0].mxu0
        %v965 = vadd.f32 0.0, %v964
        %v966 = vpop.f32.mrb[0].mxu0
        %967 = vdwg.mxu0
        %v968 = vmul.f32 %v965, 0.35355338
        %v969 = vsel %vm640, %v968, -1e+30
        %v970 = vsel %vm653, %v969, -inf
        %971 = vmax.xlane.f32.xlu0 %v970
        %v972 = vpop.xlane.xlu0 %971
        %v973 = vsub.f32 %v969, %v972
        %v974 = vmul.f32 %v973, 1.442695
        %v975 = vpow.pop %v974
        %v976 = vsel %vm653, %v975, 0.0
        %977 = vadd.xlane.f32.xlu0 %v976
        %v978 = vpop.xlane.xlu0 %977
        %v979 = vrcp.pop %v978
        %v980 = vmul.f32 %v975, %v979
        %982 = vrot.lane.b32.xlu0 %v633, 120
        %v983 = vpop.permute.xlu0 %982
        %v986 = vsel %vm653, %v980, 0
        %988 = vmatprep.subr.mxu0 0.0
        %989 = vmatpush1.msra.mxu0 %v983
        %990 = vmatprep.subr.mxu0 0.0
        %991 = vmatpush1.msra.mxu0 0.0
        %992 = vmatprep.subr.mxu0 0.0
        %993 = vmatpush1.msra.mxu0 0.0
        %994 = vmatprep.subr.mxu0 0.0
        %995 = vmatpush1.msra.mxu0 0.0
        %996 = vmatprep.subr.mxu0 0.0
        %997 = vmatpush1.msra.mxu0 0.0
        %998 = vmatprep.subr.mxu0 0.0
        %999 = vmatpush1.msra.mxu0 0.0
        %1000 = vmatprep.subr.mxu0 0.0
        %1001 = vmatpush1.msra.mxu0 0.0
        %1002 = vmatprep.subr.mxu0 0.0
        %1003 = vmatpush1.msra.mxu0 0.0
        %1004 = vmatprep.subr.mxu0 0.0
        %1005 = vmatpush1.msra.mxu0 0.0
        %1006 = vmatprep.subr.mxu0 0.0
        %1007 = vmatpush1.msra.mxu0 0.0
        %1008 = vmatprep.subr.mxu0 0.0
        %1009 = vmatpush1.msra.mxu0 0.0
        %1010 = vmatprep.subr.mxu0 0.0
        %1011 = vmatpush1.msra.mxu0 0.0
        %1012 = vmatprep.subr.mxu0 0.0
        %1013 = vmatpush1.msra.mxu0 0.0
        %1014 = vmatprep.subr.mxu0 0.0
        %1015 = vmatpush1.msra.mxu0 0.0
        %1016 = vmatprep.subr.mxu0 0.0
        %1017 = vmatpush1.msra.mxu0 0.0
        %1018 = vmatprep.subr.mxu0 0.0
        %1019 = vmatpush1.msra.mxu0 0.0
        %1020 = vmatprep.subr.mxu0 0.0
        %1021 = vmatpush1.msra.mxu0 0.0
        %1022 = vmatprep.subr.mxu0 0.0
        %1023 = vmatpush1.msra.mxu0 0.0
        %1024 = vmatprep.subr.mxu0 0.0
        %1025 = vmatpush1.msra.mxu0 0.0
        %1026 = vmatprep.subr.mxu0 0.0
        %1027 = vmatpush1.msra.mxu0 0.0
        %1028 = vmatprep.subr.mxu0 0.0
        %1029 = vmatpush1.msra.mxu0 0.0
        %1030 = vmatprep.subr.mxu0 0.0
        %1031 = vmatpush1.msra.mxu0 0.0
        %1032 = vmatprep.subr.mxu0 0.0
        %1033 = vmatpush1.msra.mxu0 0.0
        %1034 = vmatprep.subr.mxu0 0.0
        %1035 = vmatpush1.msra.mxu0 0.0
        %1036 = vmatprep.subr.mxu0 0.0
        %1037 = vmatpush1.msra.mxu0 0.0
        %1038 = vmatprep.subr.mxu0 0.0
        %1039 = vmatpush1.msra.mxu0 0.0
        %1040 = vmatprep.subr.mxu0 0.0
        %1041 = vmatpush1.msra.mxu0 0.0
        %1042 = vmatprep.subr.mxu0 0.0
        %1043 = vmatpush1.msra.mxu0 0.0
        %1044 = vmatprep.subr.mxu0 0.0
        %1045 = vmatpush1.msra.mxu0 0.0
        %1046 = vmatprep.subr.mxu0 0.0
        %1047 = vmatpush1.msra.mxu0 0.0
        %1048 = vmatprep.subr.mxu0 0.0
        %1049 = vmatpush1.msra.mxu0 0.0
        %1050 = vmatprep.subr.mxu0 0.0
        %1051 = vmatpush1.msra.mxu0 0.0
        %1052 = vmatprep.mubr.f32.mxu0 0.0
        %1053 = vmatmul.mubr.f32.gmra.mrb[0].mxu0 %v986
        %v1054 = vpop.f32.mrb[0].mxu0
        %v1055 = vadd.f32 0.0, %v1054
        %v1056 = vpop.f32.mrb[0].mxu0
        %1057 = vdwg.mxu0
        %v1059 = vsel %vm653, %v1055, 0
        %1061 = vmatprep.subr.mxu0 0.0
        %1062 = vmatpush1.msra.mxu0 %v642
        %1063 = vmatprep.subr.mxu0 0.0
        %1064 = vmatpush1.msra.mxu0 0.0
        %1065 = vmatprep.subr.mxu0 0.0
        %1066 = vmatpush1.msra.mxu0 0.0
        %1067 = vmatprep.subr.mxu0 0.0
        %1068 = vmatpush1.msra.mxu0 0.0
        %1069 = vmatprep.subr.mxu0 0.0
        %1070 = vmatpush1.msra.mxu0 0.0
        %1071 = vmatprep.subr.mxu0 0.0
        %1072 = vmatpush1.msra.mxu0 0.0
        %1073 = vmatprep.subr.mxu0 0.0
        %1074 = vmatpush1.msra.mxu0 0.0
        %1075 = vmatprep.subr.mxu0 0.0
        %1076 = vmatpush1.msra.mxu0 0.0
        %1077 = vmatprep.subr.mxu0 0.0
        %1078 = vmatpush1.msra.mxu0 0.0
        %1079 = vmatprep.subr.mxu0 0.0
        %1080 = vmatpush1.msra.mxu0 0.0
        %1081 = vmatprep.subr.mxu0 0.0
        %1082 = vmatpush1.msra.mxu0 0.0
        %1083 = vmatprep.subr.mxu0 0.0
        %1084 = vmatpush1.msra.mxu0 0.0
        %1085 = vmatprep.subr.mxu0 0.0
        %1086 = vmatpush1.msra.mxu0 0.0
        %1087 = vmatprep.subr.mxu0 0.0
        %1088 = vmatpush1.msra.mxu0 0.0
        %1089 = vmatprep.subr.mxu0 0.0
        %1090 = vmatpush1.msra.mxu0 0.0
        %1091 = vmatprep.subr.mxu0 0.0
        %1092 = vmatpush1.msra.mxu0 0.0
        %1093 = vmatprep.subr.mxu0 0.0
        %1094 = vmatpush1.msra.mxu0 0.0
        %1095 = vmatprep.subr.mxu0 0.0
        %1096 = vmatpush1.msra.mxu0 0.0
        %1097 = vmatprep.subr.mxu0 0.0
        %1098 = vmatpush1.msra.mxu0 0.0
        %1099 = vmatprep.subr.mxu0 0.0
        %1100 = vmatpush1.msra.mxu0 0.0
        %1101 = vmatprep.subr.mxu0 0.0
        %1102 = vmatpush1.msra.mxu0 0.0
        %1103 = vmatprep.subr.mxu0 0.0
        %1104 = vmatpush1.msra.mxu0 0.0
        %1105 = vmatprep.subr.mxu0 0.0
        %1106 = vmatpush1.msra.mxu0 0.0
        %1107 = vmatprep.subr.mxu0 0.0
        %1108 = vmatpush1.msra.mxu0 0.0
        %1109 = vmatprep.subr.mxu0 0.0
        %1110 = vmatpush1.msra.mxu0 0.0
        %1111 = vmatprep.subr.mxu0 0.0
        %1112 = vmatpush1.msra.mxu0 0.0
        %1113 = vmatprep.subr.mxu0 0.0
        %1114 = vmatpush1.msra.mxu0 0.0
        %1115 = vmatprep.subr.mxu0 0.0
        %1116 = vmatpush1.msra.mxu0 0.0
        %1117 = vmatprep.subr.mxu0 0.0
        %1118 = vmatpush1.msra.mxu0 0.0
        %1119 = vmatprep.subr.mxu0 0.0
        %1120 = vmatpush1.msra.mxu0 0.0
        %1121 = vmatprep.subr.mxu0 0.0
        %1122 = vmatpush1.msra.mxu0 0.0
        %1123 = vmatprep.subr.mxu0 0.0
        %1124 = vmatpush1.msra.mxu0 0.0
        %1125 = vmatprep.mubr.f32.mxu0 0.0
        %1126 = vmatmul.mubr.f32.gmra.mrb[0].mxu0 %v1059
        %v1127 = vpop.f32.mrb[0].mxu0
        %v1128 = vadd.f32 0.0, %v1127
        %v1129 = vpop.f32.mrb[0].mxu0
        %1130 = vdwg.mxu0
        %v1131 = vadd.f32 %v889, %v1128
        %1132 = vrot.lane.b32.xlu0 %v485, 112
        %v1133 = vpop.permute.xlu0 %1132
        %1134 = vrot.lane.b32.xlu0 %v559, 112
        %v1135 = vpop.permute.xlu0 %1134
        %v1136 = vsel %vm653, %v1133, 0
        %v1138 = vsel %vm653, %v1135, 0
        %1140 = vmatprep.subr.mxu0 0.0
        %1141 = vmatpush1.xpose.msra.mxu0 %v1138
        %1142 = vmatprep.subr.mxu0 0.0
        %1143 = vmatpush1.xpose.msra.mxu0 0.0
        %1144 = vmatprep.subr.mxu0 0.0
        %1145 = vmatpush1.xpose.msra.mxu0 0.0
        %1146 = vmatprep.subr.mxu0 0.0
        %1147 = vmatpush1.xpose.msra.mxu0 0.0
        %1148 = vmatprep.subr.mxu0 0.0
        %1149 = vmatpush1.xpose.msra.mxu0 0.0
        %1150 = vmatprep.subr.mxu0 0.0
        %1151 = vmatpush1.xpose.msra.mxu0 0.0
        %1152 = vmatprep.subr.mxu0 0.0
        %1153 = vmatpush1.xpose.msra.mxu0 0.0
        %1154 = vmatprep.subr.mxu0 0.0
        %1155 = vmatpush1.xpose.msra.mxu0 0.0
        %1156 = vmatprep.subr.mxu0 0.0
        %1157 = vmatpush1.xpose.msra.mxu0 0.0
        %1158 = vmatprep.subr.mxu0 0.0
        %1159 = vmatpush1.xpose.msra.mxu0 0.0
        %1160 = vmatprep.subr.mxu0 0.0
        %1161 = vmatpush1.xpose.msra.mxu0 0.0
        %1162 = vmatprep.subr.mxu0 0.0
        %1163 = vmatpush1.xpose.msra.mxu0 0.0
        %1164 = vmatprep.subr.mxu0 0.0
        %1165 = vmatpush1.xpose.msra.mxu0 0.0
        %1166 = vmatprep.subr.mxu0 0.0
        %1167 = vmatpush1.xpose.msra.mxu0 0.0
        %1168 = vmatprep.subr.mxu0 0.0
        %1169 = vmatpush1.xpose.msra.mxu0 0.0
        %1170 = vmatprep.subr.mxu0 0.0
        %1171 = vmatpush1.xpose.msra.mxu0 0.0
        %1172 = vmatprep.subr.mxu0 0.0
        %1173 = vmatpush1.xpose.msra.mxu0 0.0
        %1174 = vmatprep.subr.mxu0 0.0
        %1175 = vmatpush1.xpose.msra.mxu0 0.0
        %1176 = vmatprep.subr.mxu0 0.0
        %1177 = vmatpush1.xpose.msra.mxu0 0.0
        %1178 = vmatprep.subr.mxu0 0.0
        %1179 = vmatpush1.xpose.msra.mxu0 0.0
        %1180 = vmatprep.subr.mxu0 0.0
        %1181 = vmatpush1.xpose.msra.mxu0 0.0
        %1182 = vmatprep.subr.mxu0 0.0
        %1183 = vmatpush1.xpose.msra.mxu0 0.0
        %1184 = vmatprep.subr.mxu0 0.0
        %1185 = vmatpush1.xpose.msra.mxu0 0.0
        %1186 = vmatprep.subr.mxu0 0.0
        %1187 = vmatpush1.xpose.msra.mxu0 0.0
        %1188 = vmatprep.subr.mxu0 0.0
        %1189 = vmatpush1.xpose.msra.mxu0 0.0
        %1190 = vmatprep.subr.mxu0 0.0
        %1191 = vmatpush1.xpose.msra.mxu0 0.0
        %1192 = vmatprep.subr.mxu0 0.0
        %1193 = vmatpush1.xpose.msra.mxu0 0.0
        %1194 = vmatprep.subr.mxu0 0.0
        %1195 = vmatpush1.xpose.msra.mxu0 0.0
        %1196 = vmatprep.subr.mxu0 0.0
        %1197 = vmatpush1.xpose.msra.mxu0 0.0
        %1198 = vmatprep.subr.mxu0 0.0
        %1199 = vmatpush1.xpose.msra.mxu0 0.0
        %1200 = vmatprep.subr.mxu0 0.0
        %1201 = vmatpush1.xpose.msra.mxu0 0.0
        %1202 = vmatprep.subr.mxu0 0.0
        %1203 = vmatpush1.xpose.msra.mxu0 0.0
        %1204 = vmatprep.mubr.f32.mxu0 0.0
        %1205 = vmatmul.mubr.f32.gmra.mrb[0].mxu0 %v1136
        %v1206 = vpop.f32.mrb[0].mxu0
        %v1207 = vadd.f32 0.0, %v1206
        %v1208 = vpop.f32.mrb[0].mxu0
        %1209 = vdwg.mxu0
        %v1210 = vmul.f32 %v1207, 0.35355338
        %v1211 = vsel %vm640, %v1210, -1e+30
        %v1212 = vsel %vm653, %v1211, -inf
        %1213 = vmax.xlane.f32.xlu0 %v1212
        %v1214 = vpop.xlane.xlu0 %1213
        %v1215 = vsub.f32 %v1211, %v1214
        %v1216 = vmul.f32 %v1215, 1.442695
        %v1217 = vpow.pop %v1216
        %v1218 = vsel %vm653, %v1217, 0.0
        %1219 = vadd.xlane.f32.xlu0 %v1218
        %v1220 = vpop.xlane.xlu0 %1219
        %v1221 = vrcp.pop %v1220
        %v1222 = vmul.f32 %v1217, %v1221
        %1223 = vrot.lane.b32.xlu0 %v633, 112
        %v1224 = vpop.permute.xlu0 %1223
        %v1227 = vsel %vm653, %v1222, 0
        %1229 = vmatprep.subr.mxu0 0.0
        %1230 = vmatpush1.msra.mxu0 %v1224
        %1231 = vmatprep.subr.mxu0 0.0
        %1232 = vmatpush1.msra.mxu0 0.0
        %1233 = vmatprep.subr.mxu0 0.0
        %1234 = vmatpush1.msra.mxu0 0.0
        %1235 = vmatprep.subr.mxu0 0.0
        %1236 = vmatpush1.msra.mxu0 0.0
        %1237 = vmatprep.subr.mxu0 0.0
        %1238 = vmatpush1.msra.mxu0 0.0
        %1239 = vmatprep.subr.mxu0 0.0
        %1240 = vmatpush1.msra.mxu0 0.0
        %1241 = vmatprep.subr.mxu0 0.0
        %1242 = vmatpush1.msra.mxu0 0.0
        %1243 = vmatprep.subr.mxu0 0.0
        %1244 = vmatpush1.msra.mxu0 0.0
        %1245 = vmatprep.subr.mxu0 0.0
        %1246 = vmatpush1.msra.mxu0 0.0
        %1247 = vmatprep.subr.mxu0 0.0
        %1248 = vmatpush1.msra.mxu0 0.0
        %1249 = vmatprep.subr.mxu0 0.0
        %1250 = vmatpush1.msra.mxu0 0.0
        %1251 = vmatprep.subr.mxu0 0.0
        %1252 = vmatpush1.msra.mxu0 0.0
        %1253 = vmatprep.subr.mxu0 0.0
        %1254 = vmatpush1.msra.mxu0 0.0
        %1255 = vmatprep.subr.mxu0 0.0
        %1256 = vmatpush1.msra.mxu0 0.0
        %1257 = vmatprep.subr.mxu0 0.0
        %1258 = vmatpush1.msra.mxu0 0.0
        %1259 = vmatprep.subr.mxu0 0.0
        %1260 = vmatpush1.msra.mxu0 0.0
        %1261 = vmatprep.subr.mxu0 0.0
        %1262 = vmatpush1.msra.mxu0 0.0
        %1263 = vmatprep.subr.mxu0 0.0
        %1264 = vmatpush1.msra.mxu0 0.0
        %1265 = vmatprep.subr.mxu0 0.0
        %1266 = vmatpush1.msra.mxu0 0.0
        %1267 = vmatprep.subr.mxu0 0.0
        %1268 = vmatpush1.msra.mxu0 0.0
        %1269 = vmatprep.subr.mxu0 0.0
        %1270 = vmatpush1.msra.mxu0 0.0
        %1271 = vmatprep.subr.mxu0 0.0
        %1272 = vmatpush1.msra.mxu0 0.0
        %1273 = vmatprep.subr.mxu0 0.0
        %1274 = vmatpush1.msra.mxu0 0.0
        %1275 = vmatprep.subr.mxu0 0.0
        %1276 = vmatpush1.msra.mxu0 0.0
        %1277 = vmatprep.subr.mxu0 0.0
        %1278 = vmatpush1.msra.mxu0 0.0
        %1279 = vmatprep.subr.mxu0 0.0
        %1280 = vmatpush1.msra.mxu0 0.0
        %1281 = vmatprep.subr.mxu0 0.0
        %1282 = vmatpush1.msra.mxu0 0.0
        %1283 = vmatprep.subr.mxu0 0.0
        %1284 = vmatpush1.msra.mxu0 0.0
        %1285 = vmatprep.subr.mxu0 0.0
        %1286 = vmatpush1.msra.mxu0 0.0
        %1287 = vmatprep.subr.mxu0 0.0
        %1288 = vmatpush1.msra.mxu0 0.0
        %1289 = vmatprep.subr.mxu0 0.0
        %1290 = vmatpush1.msra.mxu0 0.0
        %1291 = vmatprep.subr.mxu0 0.0
        %1292 = vmatpush1.msra.mxu0 0.0
        %1293 = vmatprep.mubr.f32.mxu0 0.0
        %1294 = vmatmul.mubr.f32.gmra.mrb[0].mxu0 %v1227
        %v1295 = vpop.f32.mrb[0].mxu0
        %v1296 = vadd.f32 0.0, %v1295
        %v1297 = vpop.f32.mrb[0].mxu0
        %1298 = vdwg.mxu0
        %v1300 = vsel %vm653, %v1296, 0
        %1302 = vmatprep.subr.mxu0 0.0
        %1303 = vmatpush1.msra.mxu0 %v643
        %1304 = vmatprep.subr.mxu0 0.0
        %1305 = vmatpush1.msra.mxu0 0.0
        %1306 = vmatprep.subr.mxu0 0.0
        %1307 = vmatpush1.msra.mxu0 0.0
        %1308 = vmatprep.subr.mxu0 0.0
        %1309 = vmatpush1.msra.mxu0 0.0
        %1310 = vmatprep.subr.mxu0 0.0
        %1311 = vmatpush1.msra.mxu0 0.0
        %1312 = vmatprep.subr.mxu0 0.0
        %1313 = vmatpush1.msra.mxu0 0.0
        %1314 = vmatprep.subr.mxu0 0.0
        %1315 = vmatpush1.msra.mxu0 0.0
        %1316 = vmatprep.subr.mxu0 0.0
        %1317 = vmatpush1.msra.mxu0 0.0
        %1318 = vmatprep.subr.mxu0 0.0
        %1319 = vmatpush1.msra.mxu0 0.0
        %1320 = vmatprep.subr.mxu0 0.0
        %1321 = vmatpush1.msra.mxu0 0.0
        %1322 = vmatprep.subr.mxu0 0.0
        %1323 = vmatpush1.msra.mxu0 0.0
        %1324 = vmatprep.subr.mxu0 0.0
        %1325 = vmatpush1.msra.mxu0 0.0
        %1326 = vmatprep.subr.mxu0 0.0
        %1327 = vmatpush1.msra.mxu0 0.0
        %1328 = vmatprep.subr.mxu0 0.0
        %1329 = vmatpush1.msra.mxu0 0.0
        %1330 = vmatprep.subr.mxu0 0.0
        %1331 = vmatpush1.msra.mxu0 0.0
        %1332 = vmatprep.subr.mxu0 0.0
        %1333 = vmatpush1.msra.mxu0 0.0
        %1334 = vmatprep.subr.mxu0 0.0
        %1335 = vmatpush1.msra.mxu0 0.0
        %1336 = vmatprep.subr.mxu0 0.0
        %1337 = vmatpush1.msra.mxu0 0.0
        %1338 = vmatprep.subr.mxu0 0.0
        %1339 = vmatpush1.msra.mxu0 0.0
        %1340 = vmatprep.subr.mxu0 0.0
        %1341 = vmatpush1.msra.mxu0 0.0
        %1342 = vmatprep.subr.mxu0 0.0
        %1343 = vmatpush1.msra.mxu0 0.0
        %1344 = vmatprep.subr.mxu0 0.0
        %1345 = vmatpush1.msra.mxu0 0.0
        %1346 = vmatprep.subr.mxu0 0.0
        %1347 = vmatpush1.msra.mxu0 0.0
        %1348 = vmatprep.subr.mxu0 0.0
        %1349 = vmatpush1.msra.mxu0 0.0
        %1350 = vmatprep.subr.mxu0 0.0
        %1351 = vmatpush1.msra.mxu0 0.0
        %1352 = vmatprep.subr.mxu0 0.0
        %1353 = vmatpush1.msra.mxu0 0.0
        %1354 = vmatprep.subr.mxu0 0.0
        %1355 = vmatpush1.msra.mxu0 0.0
        %1356 = vmatprep.subr.mxu0 0.0
        %1357 = vmatpush1.msra.mxu0 0.0
        %1358 = vmatprep.subr.mxu0 0.0
        %1359 = vmatpush1.msra.mxu0 0.0
        %1360 = vmatprep.subr.mxu0 0.0
        %1361 = vmatpush1.msra.mxu0 0.0
        %1362 = vmatprep.subr.mxu0 0.0
        %1363 = vmatpush1.msra.mxu0 0.0
        %1364 = vmatprep.subr.mxu0 0.0
        %1365 = vmatpush1.msra.mxu0 0.0
        %1366 = vmatprep.mubr.f32.mxu0 0.0
        %1367 = vmatmul.mubr.f32.gmra.mrb[0].mxu0 %v1300
        %v1368 = vpop.f32.mrb[0].mxu0
        %v1369 = vadd.f32 0.0, %v1368
        %v1370 = vpop.f32.mrb[0].mxu0
        %1371 = vdwg.mxu0
        %v1372 = vadd.f32 %v1131, %v1369
        %1373 = vrot.lane.b32.xlu0 %v485, 104
        %v1374 = vpop.permute.xlu0 %1373
        %1375 = vrot.lane.b32.xlu0 %v559, 104
        %v1376 = vpop.permute.xlu0 %1375
        %v1377 = vsel %vm653, %v1374, 0
        %v1379 = vsel %vm653, %v1376, 0
        %1381 = vmatprep.subr.mxu0 0.0
        %1382 = vmatpush1.xpose.msra.mxu0 %v1379
        %1383 = vmatprep.subr.mxu0 0.0
        %1384 = vmatpush1.xpose.msra.mxu0 0.0
        %1385 = vmatprep.subr.mxu0 0.0
        %1386 = vmatpush1.xpose.msra.mxu0 0.0
        %1387 = vmatprep.subr.mxu0 0.0
        %1388 = vmatpush1.xpose.msra.mxu0 0.0
        %1389 = vmatprep.subr.mxu0 0.0
        %1390 = vmatpush1.xpose.msra.mxu0 0.0
        %1391 = vmatprep.subr.mxu0 0.0
        %1392 = vmatpush1.xpose.msra.mxu0 0.0
        %1393 = vmatprep.subr.mxu0 0.0
        %1394 = vmatpush1.xpose.msra.mxu0 0.0
        %1395 = vmatprep.subr.mxu0 0.0
        %1396 = vmatpush1.xpose.msra.mxu0 0.0
        %1397 = vmatprep.subr.mxu0 0.0
        %1398 = vmatpush1.xpose.msra.mxu0 0.0
        %1399 = vmatprep.subr.mxu0 0.0
        %1400 = vmatpush1.xpose.msra.mxu0 0.0
        %1401 = vmatprep.subr.mxu0 0.0
        %1402 = vmatpush1.xpose.msra.mxu0 0.0
        %1403 = vmatprep.subr.mxu0 0.0
        %1404 = vmatpush1.xpose.msra.mxu0 0.0
        %1405 = vmatprep.subr.mxu0 0.0
        %1406 = vmatpush1.xpose.msra.mxu0 0.0
        %1407 = vmatprep.subr.mxu0 0.0
        %1408 = vmatpush1.xpose.msra.mxu0 0.0
        %1409 = vmatprep.subr.mxu0 0.0
        %1410 = vmatpush1.xpose.msra.mxu0 0.0
        %1411 = vmatprep.subr.mxu0 0.0
        %1412 = vmatpush1.xpose.msra.mxu0 0.0
        %1413 = vmatprep.subr.mxu0 0.0
        %1414 = vmatpush1.xpose.msra.mxu0 0.0
        %1415 = vmatprep.subr.mxu0 0.0
        %1416 = vmatpush1.xpose.msra.mxu0 0.0
        %1417 = vmatprep.subr.mxu0 0.0
        %1418 = vmatpush1.xpose.msra.mxu0 0.0
        %1419 = vmatprep.subr.mxu0 0.0
        %1420 = vmatpush1.xpose.msra.mxu0 0.0
        %1421 = vmatprep.subr.mxu0 0.0
        %1422 = vmatpush1.xpose.msra.mxu0 0.0
        %1423 = vmatprep.subr.mxu0 0.0
        %1424 = vmatpush1.xpose.msra.mxu0 0.0
        %1425 = vmatprep.subr.mxu0 0.0
        %1426 = vmatpush1.xpose.msra.mxu0 0.0
        %1427 = vmatprep.subr.mxu0 0.0
        %1428 = vmatpush1.xpose.msra.mxu0 0.0
        %1429 = vmatprep.subr.mxu0 0.0
        %1430 = vmatpush1.xpose.msra.mxu0 0.0
        %1431 = vmatprep.subr.mxu0 0.0
        %1432 = vmatpush1.xpose.msra.mxu0 0.0
        %1433 = vmatprep.subr.mxu0 0.0
        %1434 = vmatpush1.xpose.msra.mxu0 0.0
        %1435 = vmatprep.subr.mxu0 0.0
        %1436 = vmatpush1.xpose.msra.mxu0 0.0
        %1437 = vmatprep.subr.mxu0 0.0
        %1438 = vmatpush1.xpose.msra.mxu0 0.0
        %1439 = vmatprep.subr.mxu0 0.0
        %1440 = vmatpush1.xpose.msra.mxu0 0.0
        %1441 = vmatprep.subr.mxu0 0.0
        %1442 = vmatpush1.xpose.msra.mxu0 0.0
        %1443 = vmatprep.subr.mxu0 0.0
        %1444 = vmatpush1.xpose.msra.mxu0 0.0
        %1445 = vmatprep.mubr.f32.mxu0 0.0
        %1446 = vmatmul.mubr.f32.gmra.mrb[0].mxu0 %v1377
        %v1447 = vpop.f32.mrb[0].mxu0
        %v1448 = vadd.f32 0.0, %v1447
        %v1449 = vpop.f32.mrb[0].mxu0
        %1450 = vdwg.mxu0
        %v1451 = vmul.f32 %v1448, 0.35355338
        %v1452 = vsel %vm640, %v1451, -1e+30
        %v1453 = vsel %vm653, %v1452, -inf
        %1454 = vmax.xlane.f32.xlu0 %v1453
        %v1455 = vpop.xlane.xlu0 %1454
        %v1456 = vsub.f32 %v1452, %v1455
        %v1457 = vmul.f32 %v1456, 1.442695
        %v1458 = vpow.pop %v1457
        %v1459 = vsel %vm653, %v1458, 0.0
        %1460 = vadd.xlane.f32.xlu0 %v1459
        %v1461 = vpop.xlane.xlu0 %1460
        %v1462 = vrcp.pop %v1461
        %v1463 = vmul.f32 %v1458, %v1462
        %1464 = vrot.lane.b32.xlu0 %v633, 104
        %v1465 = vpop.permute.xlu0 %1464
        %v1468 = vsel %vm653, %v1463, 0
        %1470 = vmatprep.subr.mxu0 0.0
        %1471 = vmatpush1.msra.mxu0 %v1465
        %1472 = vmatprep.subr.mxu0 0.0
        %1473 = vmatpush1.msra.mxu0 0.0
        %1474 = vmatprep.subr.mxu0 0.0
        %1475 = vmatpush1.msra.mxu0 0.0
        %1476 = vmatprep.subr.mxu0 0.0
        %1477 = vmatpush1.msra.mxu0 0.0
        %1478 = vmatprep.subr.mxu0 0.0
        %1479 = vmatpush1.msra.mxu0 0.0
        %1480 = vmatprep.subr.mxu0 0.0
        %1481 = vmatpush1.msra.mxu0 0.0
        %1482 = vmatprep.subr.mxu0 0.0
        %1483 = vmatpush1.msra.mxu0 0.0
        %1484 = vmatprep.subr.mxu0 0.0
        %1485 = vmatpush1.msra.mxu0 0.0
        %1486 = vmatprep.subr.mxu0 0.0
        %1487 = vmatpush1.msra.mxu0 0.0
        %1488 = vmatprep.subr.mxu0 0.0
        %1489 = vmatpush1.msra.mxu0 0.0
        %1490 = vmatprep.subr.mxu0 0.0
        %1491 = vmatpush1.msra.mxu0 0.0
        %1492 = vmatprep.subr.mxu0 0.0
        %1493 = vmatpush1.msra.mxu0 0.0
        %1494 = vmatprep.subr.mxu0 0.0
        %1495 = vmatpush1.msra.mxu0 0.0
        %1496 = vmatprep.subr.mxu0 0.0
        %1497 = vmatpush1.msra.mxu0 0.0
        %1498 = vmatprep.subr.mxu0 0.0
        %1499 = vmatpush1.msra.mxu0 0.0
        %1500 = vmatprep.subr.mxu0 0.0
        %1501 = vmatpush1.msra.mxu0 0.0
        %1502 = vmatprep.subr.mxu0 0.0
        %1503 = vmatpush1.msra.mxu0 0.0
        %1504 = vmatprep.subr.mxu0 0.0
        %1505 = vmatpush1.msra.mxu0 0.0
        %1506 = vmatprep.subr.mxu0 0.0
        %1507 = vmatpush1.msra.mxu0 0.0
        %1508 = vmatprep.subr.mxu0 0.0
        %1509 = vmatpush1.msra.mxu0 0.0
        %1510 = vmatprep.subr.mxu0 0.0
        %1511 = vmatpush1.msra.mxu0 0.0
        %1512 = vmatprep.subr.mxu0 0.0
        %1513 = vmatpush1.msra.mxu0 0.0
        %1514 = vmatprep.subr.mxu0 0.0
        %1515 = vmatpush1.msra.mxu0 0.0
        %1516 = vmatprep.subr.mxu0 0.0
        %1517 = vmatpush1.msra.mxu0 0.0
        %1518 = vmatprep.subr.mxu0 0.0
        %1519 = vmatpush1.msra.mxu0 0.0
        %1520 = vmatprep.subr.mxu0 0.0
        %1521 = vmatpush1.msra.mxu0 0.0
        %1522 = vmatprep.subr.mxu0 0.0
        %1523 = vmatpush1.msra.mxu0 0.0
        %1524 = vmatprep.subr.mxu0 0.0
        %1525 = vmatpush1.msra.mxu0 0.0
        %1526 = vmatprep.subr.mxu0 0.0
        %1527 = vmatpush1.msra.mxu0 0.0
        %1528 = vmatprep.subr.mxu0 0.0
        %1529 = vmatpush1.msra.mxu0 0.0
        %1530 = vmatprep.subr.mxu0 0.0
        %1531 = vmatpush1.msra.mxu0 0.0
        %1532 = vmatprep.subr.mxu0 0.0
        %1533 = vmatpush1.msra.mxu0 0.0
        %1534 = vmatprep.mubr.f32.mxu0 0.0
        %1535 = vmatmul.mubr.f32.gmra.mrb[0].mxu0 %v1468
        %v1536 = vpop.f32.mrb[0].mxu0
        %v1537 = vadd.f32 0.0, %v1536
        %v1538 = vpop.f32.mrb[0].mxu0
        %1539 = vdwg.mxu0
        %v1541 = vsel %vm653, %v1537, 0
        %1543 = vmatprep.subr.mxu0 0.0
        %1544 = vmatpush1.msra.mxu0 %v644
        %1545 = vmatprep.subr.mxu0 0.0
        %1546 = vmatpush1.msra.mxu0 0.0
        %1547 = vmatprep.subr.mxu0 0.0
        %1548 = vmatpush1.msra.mxu0 0.0
        %1549 = vmatprep.subr.mxu0 0.0
        %1550 = vmatpush1.msra.mxu0 0.0
        %1551 = vmatprep.subr.mxu0 0.0
        %1552 = vmatpush1.msra.mxu0 0.0
        %1553 = vmatprep.subr.mxu0 0.0
        %1554 = vmatpush1.msra.mxu0 0.0
        %1555 = vmatprep.subr.mxu0 0.0
        %1556 = vmatpush1.msra.mxu0 0.0
        %1557 = vmatprep.subr.mxu0 0.0
        %1558 = vmatpush1.msra.mxu0 0.0
        %1559 = vmatprep.subr.mxu0 0.0
        %1560 = vmatpush1.msra.mxu0 0.0
        %1561 = vmatprep.subr.mxu0 0.0
        %1562 = vmatpush1.msra.mxu0 0.0
        %1563 = vmatprep.subr.mxu0 0.0
        %1564 = vmatpush1.msra.mxu0 0.0
        %1565 = vmatprep.subr.mxu0 0.0
        %1566 = vmatpush1.msra.mxu0 0.0
        %1567 = vmatprep.subr.mxu0 0.0
        %1568 = vmatpush1.msra.mxu0 0.0
        %1569 = vmatprep.subr.mxu0 0.0
        %1570 = vmatpush1.msra.mxu0 0.0
        %1571 = vmatprep.subr.mxu0 0.0
        %1572 = vmatpush1.msra.mxu0 0.0
        %1573 = vmatprep.subr.mxu0 0.0
        %1574 = vmatpush1.msra.mxu0 0.0
        %1575 = vmatprep.subr.mxu0 0.0
        %1576 = vmatpush1.msra.mxu0 0.0
        %1577 = vmatprep.subr.mxu0 0.0
        %1578 = vmatpush1.msra.mxu0 0.0
        %1579 = vmatprep.subr.mxu0 0.0
        %1580 = vmatpush1.msra.mxu0 0.0
        %1581 = vmatprep.subr.mxu0 0.0
        %1582 = vmatpush1.msra.mxu0 0.0
        %1583 = vmatprep.subr.mxu0 0.0
        %1584 = vmatpush1.msra.mxu0 0.0
        %1585 = vmatprep.subr.mxu0 0.0
        %1586 = vmatpush1.msra.mxu0 0.0
        %1587 = vmatprep.subr.mxu0 0.0
        %1588 = vmatpush1.msra.mxu0 0.0
        %1589 = vmatprep.subr.mxu0 0.0
        %1590 = vmatpush1.msra.mxu0 0.0
        %1591 = vmatprep.subr.mxu0 0.0
        %1592 = vmatpush1.msra.mxu0 0.0
        %1593 = vmatprep.subr.mxu0 0.0
        %1594 = vmatpush1.msra.mxu0 0.0
        %1595 = vmatprep.subr.mxu0 0.0
        %1596 = vmatpush1.msra.mxu0 0.0
        %1597 = vmatprep.subr.mxu0 0.0
        %1598 = vmatpush1.msra.mxu0 0.0
        %1599 = vmatprep.subr.mxu0 0.0
        %1600 = vmatpush1.msra.mxu0 0.0
        %1601 = vmatprep.subr.mxu0 0.0
        %1602 = vmatpush1.msra.mxu0 0.0
        %1603 = vmatprep.subr.mxu0 0.0
        %1604 = vmatpush1.msra.mxu0 0.0
        %1605 = vmatprep.subr.mxu0 0.0
        %1606 = vmatpush1.msra.mxu0 0.0
        %1607 = vmatprep.mubr.f32.mxu0 0.0
        %1608 = vmatmul.mubr.f32.gmra.mrb[0].mxu0 %v1541
        %v1609 = vpop.f32.mrb[0].mxu0
        %v1610 = vadd.f32 0.0, %v1609
        %v1611 = vpop.f32.mrb[0].mxu0
        %1612 = vdwg.mxu0
        %v1613 = vadd.f32 %v1372, %v1610
        %v1614 = vadd.f32 %v379, %v1613
        %1615 = vst.msk [vmem:[%s378] sm:$0xff] %vm382, %v1614
        %s1616 = sand.u32 %s208, 1
        %s1617 = scalar_lea.sflag [#allocation4], %s1616
        %s1618 = sand.u32 %s208, 1
        %s1619 = smul.addr %s1618, 8
        %s1620 = scalar_lea.vmem [#allocation11], %s1619
        // Predicated region
        $region73: #{tpu_custom_call.1} parent=51 // pred_check
          %p1621 = pneg %p218
        $region74: #{tpu_custom_call.1} parent=51 // pred_check_branch
          %1623 = sbr.rel (%p1621) target = $region76
        $region75: #{tpu_custom_call.1} parent=51 // pred_region
          %s1625 = ssub.s32 128, 128
          %1626 = vsyncadd %s1617, %s1625
          %s1627 = smul.addr %s27, 128
          %s1628 = scalar_lea.hbm %s8, %s1627
          %s1630 = sshll.u32 %s1620, 4
          %s1631 = int_to_ptr.vmem [resolvable:$true] %s1630
          %1633 = dma.vmem_to_hbm [thread:$0]  %s1631, 128, %s1628, %s1617
        $region76: #{tpu_custom_call.1} parent=51 // pred_fallthru
          _
      $region52: #{tpu_custom_call.1} parent=5 // pred_fallthru
        _
      %p1634 = scmp.le.s32.totalorder 2, %s22
      // Predicated region
      $region77: #{tpu_custom_call.1} parent=5 // pred_check
        %p1635 = pneg %p1634
      $region78: #{tpu_custom_call.1} parent=5 // pred_check_branch
        %1637 = sbr.rel (%p1635) target = $region80
      $region79: #{tpu_custom_call.1} parent=5 // pred_region
        %s1638 = ssub.s32 %s22, 2
        // Predicated region
        $region81: #{tpu_custom_call.1} parent=79 // pred_check
          %p1639 = pneg %p224
        $region82: #{tpu_custom_call.1} parent=79 // pred_check_branch
          %1641 = sbr.rel (%p1639) target = $region84
        $region83: #{tpu_custom_call.1} parent=79 // pred_region
          %s1642 = sand.u32 %s209, 1
          %s1643 = scalar_lea.sflag [#allocation4], %s1642
          %s1644 = sand.u32 %s209, 1
          %s1645 = smul.addr %s1644, 8
          %s1646 = scalar_lea.vmem [#allocation11], %s1645
          %1647 = dma.done %s1643, 128
        $region84: #{tpu_custom_call.1} parent=79 // pred_fallthru
          _
      $region80: #{tpu_custom_call.1} parent=5 // pred_fallthru
        _
    $region6: #{tpu_custom_call.1} parent=1 // loop_footer
      %s26 = sadd.s32 1, %s22
    $region7: #{tpu_custom_call.1} parent=1 // loop_footer_branch
      %21 = sbr.rel target = $region3
    $region8: #{tpu_custom_call.1} parent=1 // loop_exit
      _
    %1648 = vsyncpa [#allocation3], 1
    %s1649 = scalar_lea.sflag [#allocation3], 1
    %1650 = vsyncpa %s1649, 1
    %1651 = vsyncpa [#allocation6], 1
    %1652 = vsyncpa [#allocation9], 1
    %1653 = vsyncpa [#allocation4], 1
    %s1654 = scalar_lea.sflag [#allocation4], 1
    %1655 = vsyncpa %s1654, 1

</llo_original>
